<compile_context>
chip_gen: v7x
topology: tpu7x:2x2x1
jax: 0.10.0
libtpu: 0.0.40
codegen_flags: <defaults>
</compile_context>

<pallas_src>
import functools
import numpy as np
import jax
import jax.numpy as jnp
from jax.experimental import pallas as pl
from jax.experimental.pallas import tpu as pltpu

# ----------------------------- config (small) -------------------------------
TOKEN_DIM = 128        # token_dim (reduced from 384 for a small synthetic run)
TAG_DIM   = 256        # tag encoder output dim (reduced from 1024)
GEO_DIM   = 256        # geometry encoder output dim (reduced from 2048)
IMG_DIM   = 256        # image encoder output dim (reduced from 768)
GRID_SIZE = 14         # ViT patch grid (kept: 14*14 = 196 patches + 1 cls = 197)
NUM_PATCHES = GRID_SIZE * GRID_SIZE
NUM_IMG_TOKENS = NUM_PATCHES + 1
LN_EPS    = 1e-5       # PyTorch nn.LayerNorm default

MOD_PAD, MOD_OSM, MOD_GEO, MOD_IMG = 0, 1, 2, 3   # MOD_GEO unused: tag+geo fuse to OSM


# =============================== Pallas kernel ===============================
def _layernorm(y, gamma_row, beta_row):
    """Row-wise LayerNorm over the last dim (two-pass centered variance, f32)."""
    mean = jnp.mean(y, axis=-1, keepdims=True)
    yc = y - mean
    var = jnp.mean(yc * yc, axis=-1, keepdims=True)
    return yc * jax.lax.rsqrt(var + LN_EPS) * gamma_row + beta_row


def tokenizer_kernel(tag_ref, geo_ref, cls_ref, patch_ref,
                     wt_ref, wg_ref, w1_ref, w2_ref, ws_ref, vec_ref,
                     osm_ref, img_ref):
    """Per-batch fused TileTokenizer projections.

    vec_ref packs all small parameter vectors in a single (8, 2*TOKEN_DIM) f32 slab:
      row 0: [tag_proj_b | geo_proj_b]
      row 1: [tag_norm_g | geo_norm_g]
      row 2: [tag_norm_b | geo_norm_b]
      row 3:  fusion_b1                     (full 2*TOKEN_DIM)
      row 4: [fusion_b2 | sat_proj_b]
      row 5: [sat_norm_g | sat_norm_b]
    """
    D = TOKEN_DIM
    f32 = jnp.float32

    # ------------------ OSM branch: tag / geo proj + LN, fusion MLP ---------
    tag_y = jnp.dot(tag_ref[0], wt_ref[...],
                    preferred_element_type=f32) + vec_ref[0:1, :D]
    tag_tok = _layernorm(tag_y, vec_ref[1:2, :D], vec_ref[2:3, :D])

    geo_y = jnp.dot(geo_ref[0], wg_ref[...],
                    preferred_element_type=f32) + vec_ref[0:1, D:]
    geo_tok = _layernorm(geo_y, vec_ref[1:2, D:], vec_ref[2:3, D:])

    # Lane concat of two 128-wide f32 tiles (free vreg relabel), then a single
    # K=256 contraction that fills the 256-deep MXU on v6e/v7x.
    # TODO(synk): geo_tag_fusion MLP class not provided; assumed Linear-ReLU-Linear.
    osm_in = jnp.concatenate([tag_tok, geo_tok], axis=-1).astype(jnp.bfloat16)
    h = jnp.dot(osm_in, w1_ref[...], preferred_element_type=f32) + vec_ref[3:4, :]
    h = jnp.maximum(h, 0.0).astype(jnp.bfloat16)
    osm = jnp.dot(h, w2_ref[...], preferred_element_type=f32) + vec_ref[4:5, :D]
    osm_ref[0] = osm.astype(osm_ref.dtype)

    # ------------------ image branch: [cls | patches] sat proj + LN ---------
    sat_b = vec_ref[4:5, D:]
    sat_g = vec_ref[5:6, :D]
    sat_bt = vec_ref[5:6, D:]

    cls_y = jnp.dot(cls_ref[0], ws_ref[...], preferred_element_type=f32) + sat_b
    img_ref[0, 0:1, :] = _layernorm(cls_y, sat_g, sat_bt).astype(img_ref.dtype)

    patch_y = jnp.dot(patch_ref[0], ws_ref[...], preferred_element_type=f32) + sat_b
    img_ref[0, 1:, :] = _layernorm(patch_y, sat_g, sat_bt).astype(img_ref.dtype)


def tokenizer_kernel_call(tag_b, geo_b, cls_b, patch_b, wt, wg, w1, w2, ws, vec):
    """One pallas_call for the whole tokenizer hot path. Grid over batch."""
    B, max_feat, _ = tag_b.shape
    osm_tok, img_tok = pl.pallas_call(
        tokenizer_kernel,
        out_shape=(
            jax.ShapeDtypeStruct((B, max_feat, TOKEN_DIM), jnp.float32),
            jax.ShapeDtypeStruct((B, NUM_IMG_TOKENS, TOKEN_DIM), jnp.float32),
        ),
        grid=(B,),
        in_specs=[
            pl.BlockSpec((1, max_feat, TAG_DIM), lambda i: (i, 0, 0)),
            pl.BlockSpec((1, max_feat, GEO_DIM), lambda i: (i, 0, 0)),
            pl.BlockSpec((1, 1, IMG_DIM), lambda i: (i, 0, 0)),
            pl.BlockSpec((1, NUM_PATCHES, IMG_DIM), lambda i: (i, 0, 0)),
            pl.BlockSpec((TAG_DIM, TOKEN_DIM), lambda i: (0, 0)),
            pl.BlockSpec((GEO_DIM, TOKEN_DIM), lambda i: (0, 0)),
            pl.BlockSpec((2 * TOKEN_DIM, 2 * TOKEN_DIM), lambda i: (0, 0)),
            pl.BlockSpec((2 * TOKEN_DIM, TOKEN_DIM), lambda i: (0, 0)),
            pl.BlockSpec((IMG_DIM, TOKEN_DIM), lambda i: (0, 0)),
            pl.BlockSpec((8, 2 * TOKEN_DIM), lambda i: (0, 0)),
        ],
        out_specs=(
            pl.BlockSpec((1, max_feat, TOKEN_DIM), lambda i: (i, 0, 0)),
            pl.BlockSpec((1, NUM_IMG_TOKENS, TOKEN_DIM), lambda i: (i, 0, 0)),
        ),
        compiler_params=pltpu.CompilerParams(
            dimension_semantics=("parallel",)),   # B >= 2 -> v7x's 2 TCs both used
    )(tag_b, geo_b, cls_b, patch_b, wt, wg, w1, w2, ws, vec)
    return osm_tok, img_tok


# ================================ JAX glue ===================================
def compute_normalized_bboxes(batch_size, grid_size):
    idx = jnp.arange(grid_size * grid_size, dtype=jnp.float32).reshape(
        1, grid_size, grid_size)
    idx = jnp.broadcast_to(idx, (batch_size, grid_size, grid_size))
    step = 1.0 / grid_size
    x_min = jnp.mod(idx, grid_size) * step
    y_min = 1.0 - jnp.floor(idx / grid_size) * step - step
    x_max = x_min + step
    y_max = y_min + step
    bboxes = jnp.stack([
        jnp.stack([x_min, y_min], axis=-1),
        jnp.stack([x_min, y_max], axis=-1),
        jnp.stack([x_max, y_max], axis=-1),
        jnp.stack([x_max, y_min], axis=-1),
    ], axis=-2)
    return bboxes.reshape(batch_size, grid_size * grid_size, 8)


def split_feat_embs_to_batch(embs, counts):
    """(NUM_FEATURES, D) -> (B, MAX_TILE_FEATURES, D) with zero padding."""
    counts = np.asarray(counts)
    bsz = counts.shape[0]
    max_features = int(counts.max())
    batch_idx = np.repeat(np.arange(bsz), counts)
    starts = np.concatenate([[0], np.cumsum(counts)[:-1]])
    positions = np.arange(embs.shape[0]) - starts[batch_idx]
    out = jnp.zeros((bsz, max_features, embs.shape[1]), dtype=embs.dtype)
    return out.at[batch_idx, positions].set(embs)


def _gather_rows(src, idx, width):
    return jnp.take_along_axis(
        src, jnp.broadcast_to(idx, idx.shape[:2] + (width,)), axis=1)


def assemble_tokens(osm_tokens, osm_bboxes, img_tokens, img_bboxes, counts):
    """Vectorized replacement for the per-batch assembly loop.

    For batch i: [osm_tokens[i, :m_i] | img_tokens[i] | zero pad].
    """
    # TODO(synk): fold this scatter into the pallas_call output index_maps via
    # PrefetchScalarGridSpec (counts in SMEM) to save one full HBM pass.
    B, max_feat, tok_d = osm_tokens.shape
    num_imgs = img_tokens.shape[1]
    counts = np.asarray(counts)
    max_tokens = int((counts + num_imgs).max())

    m = jnp.asarray(counts, jnp.int32)[:, None]                          # (B, 1)
    j = jnp.broadcast_to(jnp.arange(max_tokens, dtype=jnp.int32)[None, :],
                         (B, max_tokens))                                # (B, T)
    is_osm = j < m
    is_img = jnp.logical_and(j >= m, j < m + num_imgs)

    osm_idx = jnp.clip(j, 0, max_feat - 1)[..., None]
    img_idx = jnp.clip(j - m, 0, num_imgs - 1)[..., None]

    osm_t = _gather_rows(osm_tokens, osm_idx, tok_d)
    img_t = _gather_rows(img_tokens, img_idx, tok_d)
    osm_p = _gather_rows(osm_bboxes, osm_idx, 8)
    img_p = _gather_rows(img_bboxes, img_idx, 8)

    tokens = jnp.where(is_osm[..., None], osm_t,
                       jnp.where(is_img[..., None], img_t, 0.0))
    positions = jnp.where(is_osm[..., None], osm_p,
                          jnp.where(is_img[..., None], img_p, 0.0))
    # Reference creates modalities with torch.zeros (float32) and assigns ints.
    modalities = jnp.where(is_osm, float(MOD_OSM),
                           jnp.where(is_img, float(MOD_IMG), float(MOD_PAD)))
    return tokens, positions, modalities.astype(jnp.float32)


def pack_param_vectors(p):
    D = TOKEN_DIM
    vec = jnp.zeros((8, 2 * D), jnp.float32)
    vec = vec.at[0, :D].set(p["tag_proj_b"]).at[0, D:].set(p["geo_proj_b"])
    vec = vec.at[1, :D].set(p["tag_norm_g"]).at[1, D:].set(p["geo_norm_g"])
    vec = vec.at[2, :D].set(p["tag_norm_b"]).at[2, D:].set(p["geo_norm_b"])
    vec = vec.at[3, :].set(p["fusion_b1"])
    vec = vec.at[4, :D].set(p["fusion_b2"]).at[4, D:].set(p["sat_proj_b"])
    vec = vec.at[5, :D].set(p["sat_norm_g"]).at[5, D:].set(p["sat_norm_b"])
    return vec


# ============================ TileTokenizer forward ==========================
def init_params(key):
    ks = jax.random.split(key, 5)
    scale = 0.02
    return {
        "tag_proj_w": scale * jax.random.normal(ks[0], (TAG_DIM, TOKEN_DIM), jnp.float32),
        "tag_proj_b": jnp.zeros((TOKEN_DIM,), jnp.float32),
        "geo_proj_w": scale * jax.random.normal(ks[1], (GEO_DIM, TOKEN_DIM), jnp.float32),
        "geo_proj_b": jnp.zeros((TOKEN_DIM,), jnp.float32),
        "sat_proj_w": scale * jax.random.normal(ks[2], (IMG_DIM, TOKEN_DIM), jnp.float32),
        "sat_proj_b": jnp.zeros((TOKEN_DIM,), jnp.float32),
        "tag_norm_g": jnp.ones((TOKEN_DIM,), jnp.float32),
        "tag_norm_b": jnp.zeros((TOKEN_DIM,), jnp.float32),
        "geo_norm_g": jnp.ones((TOKEN_DIM,), jnp.float32),
        "geo_norm_b": jnp.zeros((TOKEN_DIM,), jnp.float32),
        "sat_norm_g": jnp.ones((TOKEN_DIM,), jnp.float32),
        "sat_norm_b": jnp.zeros((TOKEN_DIM,), jnp.float32),
        "fusion_w1": scale * jax.random.normal(ks[3], (2 * TOKEN_DIM, 2 * TOKEN_DIM), jnp.float32),
        "fusion_b1": jnp.zeros((2 * TOKEN_DIM,), jnp.float32),
        "fusion_w2": scale * jax.random.normal(ks[4], (2 * TOKEN_DIM, TOKEN_DIM), jnp.float32),
        "fusion_b2": jnp.zeros((TOKEN_DIM,), jnp.float32),
    }


@functools.partial(jax.jit, static_argnames=("feature_counts",))
def tile_tokenizer_forward(params, tag_embs, geo_embs_cat, feature_counts,
                           min_boxes, sat_cls_raw, sat_patch_raw):
    """Returns (tokens, positions, modalities) exactly like TileTokenizer.forward
    in eval mode with tokenize_{tags,geometry,images}=True."""
    counts = np.asarray(feature_counts)
    B = int(counts.shape[0])

    bf16 = jnp.bfloat16
    geo_padded = split_feat_embs_to_batch(geo_embs_cat, counts)
    vec = pack_param_vectors(params)

    # Single fused Pallas call: OSM branch + image branch, bf16 matmul operands,
    # f32 accumulation / LayerNorm. No pre-kernel pad or [cls|patches] concat.
    osm_tokens, img_tokens = tokenizer_kernel_call(
        tag_embs.astype(bf16),
        geo_padded.astype(bf16),
        sat_cls_raw.reshape(B, 1, IMG_DIM).astype(bf16),
        sat_patch_raw.astype(bf16),
        params["tag_proj_w"].astype(bf16),
        params["geo_proj_w"].astype(bf16),
        params["fusion_w1"].astype(bf16),
        params["fusion_w2"].astype(bf16),
        params["sat_proj_w"].astype(bf16),
        vec,
    )

    osm_bboxes = min_boxes.reshape(B, -1, 8)
    sat_patch_bboxes = compute_normalized_bboxes(B, GRID_SIZE)
    sat_cls_bbox = jnp.tile(
        jnp.array([0, 0, 0, 1, 1, 1, 1, 0], jnp.float32)[None, None, :], (B, 1, 1))
    img_bboxes = jnp.concatenate([sat_cls_bbox, sat_patch_bboxes], axis=1)

    return assemble_tokens(osm_tokens, osm_bboxes, img_tokens, img_bboxes, counts)


# ==================================== main ===================================
if __name__ == "__main__":
    key = jax.random.PRNGKey(0)
    kp, k1, k2, k3, k4, k5 = jax.random.split(key, 6)

    params = init_params(kp)

    B = 2
    feature_counts = (3, 5)                       # features per tile (static)
    counts = np.asarray(feature_counts, np.int32)
    nbr_features = int(counts.sum())
    max_feat = int(counts.max())

    # synthetic frozen-encoder outputs (TagEncoder / geometry GNN / ViT-B16)
    tag_embs = jax.random.normal(k1, (B, max_feat, TAG_DIM), jnp.float32)
    geo_embs_cat = jax.random.normal(k2, (nbr_features, GEO_DIM), jnp.float32)
    min_boxes = jax.random.uniform(k3, (B, max_feat, 8), jnp.float32)
    sat_cls_raw = jax.random.normal(k4, (B, IMG_DIM), jnp.float32)
    sat_patch_raw = jax.random.normal(k5, (B, NUM_PATCHES, IMG_DIM), jnp.float32)

    tokens, positions, modalities = tile_tokenizer_forward(
        params, tag_embs, geo_embs_cat,
        feature_counts=feature_counts,
        min_boxes=min_boxes,
        sat_cls_raw=sat_cls_raw,
        sat_patch_raw=sat_patch_raw)

    jax.block_until_ready((tokens, positions, modalities))

    T = int((counts + NUM_IMG_TOKENS).max())
    assert tokens.shape == (B, T, TOKEN_DIM)
    assert positions.shape == (B, T, 8)
    assert modalities.shape == (B, T)
    assert bool(jnp.all(jnp.isfinite(tokens)))
    print("KERNEL_OK")
</pallas_src>

<mosaic_0001>
module attributes {stable_mosaic.version = 11 : i64} {
  func.func private @main(%arg0: i32) attributes {dimension_semantics = [#tpu.dimension_semantics<core_parallel>], iteration_bounds = array<i64: 2>, tpu.core_type = #tpu.core_type<sc_scalar_subcore>, window_params = []} {
    return
  }
}

module attributes {stable_mosaic.version = 11 : i64} {
  func.func private @main(%arg0: i32) attributes {dimension_semantics = [#tpu.dimension_semantics<core_parallel>], iteration_bounds = array<i64: 2>, tpu.core_type = #tpu.core_type<sc_scalar_subcore>, window_params = []} {
    return
  }
}

module attributes {stable_mosaic.version = 11 : i64} {
  func.func @tokenizer_kernel(%arg0: i32, %arg1: memref<1x5x256xbf16, #tpu.memory_space<vmem>>, %arg2: memref<1x5x256xbf16, #tpu.memory_space<vmem>>, %arg3: memref<1x1x256xbf16, #tpu.memory_space<vmem>>, %arg4: memref<1x196x256xbf16, #tpu.memory_space<vmem>>, %arg5: memref<256x128xbf16, #tpu.memory_space<vmem>>, %arg6: memref<256x128xbf16, #tpu.memory_space<vmem>>, %arg7: memref<256x256xbf16, #tpu.memory_space<vmem>>, %arg8: memref<256x128xbf16, #tpu.memory_space<vmem>>, %arg9: memref<256x128xbf16, #tpu.memory_space<vmem>>, %arg10: memref<8x256xf32, #tpu.memory_space<vmem>>, %arg11: memref<1x5x128xf32, #tpu.memory_space<vmem>>, %arg12: memref<1x197x128xf32, #tpu.memory_space<vmem>>) attributes {dimension_semantics = [#tpu.dimension_semantics<parallel>], iteration_bounds = array<i64: 2>, scalar_prefetch = 0 : i64, scratch_operands = 0 : i64, tpu.core_type = #tpu.core_type<tc>, window_params = [{transform_indices = @transform_0, window_bounds = array<i64: 1, 5, 256>}, {transform_indices = @transform_1, window_bounds = array<i64: 1, 5, 256>}, {transform_indices = @transform_2, window_bounds = array<i64: 1, 1, 256>}, {transform_indices = @transform_3, window_bounds = array<i64: 1, 196, 256>}, {pipeline_mode = #tpu.pipeline_mode<synchronous>, transform_indices = @transform_4, window_bounds = array<i64: 256, 128>}, {pipeline_mode = #tpu.pipeline_mode<synchronous>, transform_indices = @transform_5, window_bounds = array<i64: 256, 128>}, {pipeline_mode = #tpu.pipeline_mode<synchronous>, transform_indices = @transform_6, window_bounds = array<i64: 256, 256>}, {pipeline_mode = #tpu.pipeline_mode<synchronous>, transform_indices = @transform_7, window_bounds = array<i64: 256, 128>}, {pipeline_mode = #tpu.pipeline_mode<synchronous>, transform_indices = @transform_8, window_bounds = array<i64: 256, 128>}, {pipeline_mode = #tpu.pipeline_mode<synchronous>, transform_indices = @transform_9, window_bounds = array<i64: 8, 256>}, {transform_indices = @transform_10, window_bounds = array<i64: 1, 5, 128>}, {transform_indices = @transform_11, window_bounds = array<i64: 1, 197, 128>}]} {
    %c0 = arith.constant 0 : index
    %c0_0 = arith.constant 0 : index
    %c0_1 = arith.constant 0 : index
    %0 = vector.load %arg1[%c0, %c0_0, %c0_1] : memref<1x5x256xbf16, #tpu.memory_space<vmem>>, vector<1x5x256xbf16>
    %1 = vector.shape_cast %0 : vector<1x5x256xbf16> to vector<5x256xbf16>
    %c0_2 = arith.constant 0 : index
    %c0_3 = arith.constant 0 : index
    %2 = vector.load %arg5[%c0_2, %c0_3] : memref<256x128xbf16, #tpu.memory_space<vmem>>, vector<256x128xbf16>
    %cst = arith.constant dense<0.000000e+00> : vector<5x128xf32>
    %3 = tpu.matmul %1, %2, %cst {dimension_numbers = #tpu.dot_dimension_numbers<[1], [0], [0], [1], [0, 0, 1, 1], [], []>} : vector<5x256xbf16>, vector<256x128xbf16>, vector<5x128xf32> -> vector<5x128xf32>
    %c0_4 = arith.constant 0 : index
    %c0_5 = arith.constant 0 : index
    %4 = vector.load %arg10[%c0_4, %c0_5] : memref<8x256xf32, #tpu.memory_space<vmem>>, vector<1x128xf32>
    %5 = vector.broadcast %4 : vector<1x128xf32> to vector<5x128xf32>
    %6 = arith.addf %3, %5 : vector<5x128xf32>
    %c1 = arith.constant 1 : index
    %c0_6 = arith.constant 0 : index
    %7 = vector.load %arg10[%c1, %c0_6] : memref<8x256xf32, #tpu.memory_space<vmem>>, vector<1x128xf32>
    %c2 = arith.constant 2 : index
    %c0_7 = arith.constant 0 : index
    %8 = vector.load %arg10[%c2, %c0_7] : memref<8x256xf32, #tpu.memory_space<vmem>>, vector<1x128xf32>
    %cst_8 = arith.constant dense<0.000000e+00> : vector<5xf32>
    %9 = vector.multi_reduction <add>, %6, %cst_8 [1] : vector<5x128xf32> to vector<5xf32>
    %10 = vector.shape_cast %9 : vector<5xf32> to vector<5x1xf32>
    %cst_9 = arith.constant 1.280000e+02 : f32
    %11 = vector.broadcast %cst_9 : f32 to vector<5x1xf32>
    %12 = arith.divf %10, %11 : vector<5x1xf32>
    %13 = vector.broadcast %12 : vector<5x1xf32> to vector<5x128xf32>
    %14 = arith.subf %6, %13 : vector<5x128xf32>
    %15 = arith.mulf %14, %14 : vector<5x128xf32>
    %cst_10 = arith.constant dense<0.000000e+00> : vector<5xf32>
    %16 = vector.multi_reduction <add>, %15, %cst_10 [1] : vector<5x128xf32> to vector<5xf32>
    %17 = vector.shape_cast %16 : vector<5xf32> to vector<5x1xf32>
    %cst_11 = arith.constant 1.280000e+02 : f32
    %18 = vector.broadcast %cst_11 : f32 to vector<5x1xf32>
    %19 = arith.divf %17, %18 : vector<5x1xf32>
    %cst_12 = arith.constant 9.99999974E-6 : f32
    %20 = vector.broadcast %cst_12 : f32 to vector<5x1xf32>
    %21 = arith.addf %19, %20 : vector<5x1xf32>
    %22 = math.rsqrt %21 : vector<5x1xf32>
    %23 = vector.broadcast %22 : vector<5x1xf32> to vector<5x128xf32>
    %24 = arith.mulf %14, %23 : vector<5x128xf32>
    %25 = vector.broadcast %7 : vector<1x128xf32> to vector<5x128xf32>
    %26 = arith.mulf %24, %25 : vector<5x128xf32>
    %27 = vector.broadcast %8 : vector<1x128xf32> to vector<5x128xf32>
    %28 = arith.addf %26, %27 : vector<5x128xf32>
    %c0_13 = arith.constant 0 : index
    %c0_14 = arith.constant 0 : index
    %c0_15 = arith.constant 0 : index
    %29 = vector.load %arg2[%c0_13, %c0_14, %c0_15] : memref<1x5x256xbf16, #tpu.memory_space<vmem>>, vector<1x5x256xbf16>
    %30 = vector.shape_cast %29 : vector<1x5x256xbf16> to vector<5x256xbf16>
    %c0_16 = arith.constant 0 : index
    %c0_17 = arith.constant 0 : index
    %31 = vector.load %arg6[%c0_16, %c0_17] : memref<256x128xbf16, #tpu.memory_space<vmem>>, vector<256x128xbf16>
    %cst_18 = arith.constant dense<0.000000e+00> : vector<5x128xf32>
    %32 = tpu.matmul %30, %31, %cst_18 {dimension_numbers = #tpu.dot_dimension_numbers<[1], [0], [0], [1], [0, 0, 1, 1], [], []>} : vector<5x256xbf16>, vector<256x128xbf16>, vector<5x128xf32> -> vector<5x128xf32>
    %c0_19 = arith.constant 0 : index
    %c128 = arith.constant 128 : index
    %33 = vector.load %arg10[%c0_19, %c128] : memref<8x256xf32, #tpu.memory_space<vmem>>, vector<1x128xf32>
    %34 = vector.broadcast %33 : vector<1x128xf32> to vector<5x128xf32>
    %35 = arith.addf %32, %34 : vector<5x128xf32>
    %c1_20 = arith.constant 1 : index
    %c128_21 = arith.constant 128 : index
    %36 = vector.load %arg10[%c1_20, %c128_21] : memref<8x256xf32, #tpu.memory_space<vmem>>, vector<1x128xf32>
    %c2_22 = arith.constant 2 : index
    %c128_23 = arith.constant 128 : index
    %37 = vector.load %arg10[%c2_22, %c128_23] : memref<8x256xf32, #tpu.memory_space<vmem>>, vector<1x128xf32>
    %cst_24 = arith.constant dense<0.000000e+00> : vector<5xf32>
    %38 = vector.multi_reduction <add>, %35, %cst_24 [1] : vector<5x128xf32> to vector<5xf32>
    %39 = vector.shape_cast %38 : vector<5xf32> to vector<5x1xf32>
    %cst_25 = arith.constant 1.280000e+02 : f32
    %40 = vector.broadcast %cst_25 : f32 to vector<5x1xf32>
    %41 = arith.divf %39, %40 : vector<5x1xf32>
    %42 = vector.broadcast %41 : vector<5x1xf32> to vector<5x128xf32>
    %43 = arith.subf %35, %42 : vector<5x128xf32>
    %44 = arith.mulf %43, %43 : vector<5x128xf32>
    %cst_26 = arith.constant dense<0.000000e+00> : vector<5xf32>
    %45 = vector.multi_reduction <add>, %44, %cst_26 [1] : vector<5x128xf32> to vector<5xf32>
    %46 = vector.shape_cast %45 : vector<5xf32> to vector<5x1xf32>
    %cst_27 = arith.constant 1.280000e+02 : f32
    %47 = vector.broadcast %cst_27 : f32 to vector<5x1xf32>
    %48 = arith.divf %46, %47 : vector<5x1xf32>
    %cst_28 = arith.constant 9.99999974E-6 : f32
    %49 = vector.broadcast %cst_28 : f32 to vector<5x1xf32>
    %50 = arith.addf %48, %49 : vector<5x1xf32>
    %51 = math.rsqrt %50 : vector<5x1xf32>
    %52 = vector.broadcast %51 : vector<5x1xf32> to vector<5x128xf32>
    %53 = arith.mulf %43, %52 : vector<5x128xf32>
    %54 = vector.broadcast %36 : vector<1x128xf32> to vector<5x128xf32>
    %55 = arith.mulf %53, %54 : vector<5x128xf32>
    %56 = vector.broadcast %37 : vector<1x128xf32> to vector<5x128xf32>
    %57 = arith.addf %55, %56 : vector<5x128xf32>
    %58 = tpu.concatenate %28, %57 in 1 : vector<5x128xf32>, vector<5x128xf32> -> vector<5x256xf32>
    %59 = arith.truncf %58 : vector<5x256xf32> to vector<5x256xbf16>
    %c0_29 = arith.constant 0 : index
    %c0_30 = arith.constant 0 : index
    %60 = vector.load %arg7[%c0_29, %c0_30] : memref<256x256xbf16, #tpu.memory_space<vmem>>, vector<256x256xbf16>
    %cst_31 = arith.constant dense<0.000000e+00> : vector<5x256xf32>
    %61 = tpu.matmul %59, %60, %cst_31 {dimension_numbers = #tpu.dot_dimension_numbers<[1], [0], [0], [1], [0, 0, 1, 1], [], []>} : vector<5x256xbf16>, vector<256x256xbf16>, vector<5x256xf32> -> vector<5x256xf32>
    %c3 = arith.constant 3 : index
    %c0_32 = arith.constant 0 : index
    %62 = vector.load %arg10[%c3, %c0_32] : memref<8x256xf32, #tpu.memory_space<vmem>>, vector<1x256xf32>
    %63 = vector.broadcast %62 : vector<1x256xf32> to vector<5x256xf32>
    %64 = arith.addf %61, %63 : vector<5x256xf32>
    %cst_33 = arith.constant 0.000000e+00 : f32
    %65 = vector.broadcast %cst_33 : f32 to vector<5x256xf32>
    %66 = arith.maximumf %64, %65 : vector<5x256xf32>
    %67 = arith.truncf %66 : vector<5x256xf32> to vector<5x256xbf16>
    %c0_34 = arith.constant 0 : index
    %c0_35 = arith.constant 0 : index
    %68 = vector.load %arg8[%c0_34, %c0_35] : memref<256x128xbf16, #tpu.memory_space<vmem>>, vector<256x128xbf16>
    %cst_36 = arith.constant dense<0.000000e+00> : vector<5x128xf32>
    %69 = tpu.matmul %67, %68, %cst_36 {dimension_numbers = #tpu.dot_dimension_numbers<[1], [0], [0], [1], [0, 0, 1, 1], [], []>} : vector<5x256xbf16>, vector<256x128xbf16>, vector<5x128xf32> -> vector<5x128xf32>
    %c4 = arith.constant 4 : index
    %c0_37 = arith.constant 0 : index
    %70 = vector.load %arg10[%c4, %c0_37] : memref<8x256xf32, #tpu.memory_space<vmem>>, vector<1x128xf32>
    %71 = vector.broadcast %70 : vector<1x128xf32> to vector<5x128xf32>
    %72 = arith.addf %69, %71 : vector<5x128xf32>
    %c0_38 = arith.constant 0 : index
    %c0_39 = arith.constant 0 : index
    %c0_40 = arith.constant 0 : index
    %73 = vector.load %arg11[%c0_38, %c0_39, %c0_40] : memref<1x5x128xf32, #tpu.memory_space<vmem>>, vector<1x5x128xf32>
    %74 = vector.shape_cast %73 : vector<1x5x128xf32> to vector<5x128xf32>
    %75 = vector.shape_cast %72 : vector<5x128xf32> to vector<1x5x128xf32>
    tpu.vector_store %arg11[%c0_38, %c0_39, %c0_40], %75 {strides = array<i32>} : memref<1x5x128xf32, #tpu.memory_space<vmem>>, vector<1x5x128xf32>,
    %c4_41 = arith.constant 4 : index
    %c128_42 = arith.constant 128 : index
    %76 = vector.load %arg10[%c4_41, %c128_42] : memref<8x256xf32, #tpu.memory_space<vmem>>, vector<1x128xf32>
    %c5 = arith.constant 5 : index
    %c0_43 = arith.constant 0 : index
    %77 = vector.load %arg10[%c5, %c0_43] : memref<8x256xf32, #tpu.memory_space<vmem>>, vector<1x128xf32>
    %c5_44 = arith.constant 5 : index
    %c128_45 = arith.constant 128 : index
    %78 = vector.load %arg10[%c5_44, %c128_45] : memref<8x256xf32, #tpu.memory_space<vmem>>, vector<1x128xf32>
    %c0_46 = arith.constant 0 : index
    %c0_47 = arith.constant 0 : index
    %c0_48 = arith.constant 0 : index
    %79 = vector.load %arg3[%c0_46, %c0_47, %c0_48] : memref<1x1x256xbf16, #tpu.memory_space<vmem>>, vector<1x1x256xbf16>
    %80 = vector.shape_cast %79 : vector<1x1x256xbf16> to vector<1x256xbf16>
    %c0_49 = arith.constant 0 : index
    %c0_50 = arith.constant 0 : index
    %81 = vector.load %arg9[%c0_49, %c0_50] : memref<256x128xbf16, #tpu.memory_space<vmem>>, vector<256x128xbf16>
    %cst_51 = arith.constant dense<0.000000e+00> : vector<1x128xf32>
    %82 = tpu.matmul %80, %81, %cst_51 {dimension_numbers = #tpu.dot_dimension_numbers<[1], [0], [0], [1], [0, 0, 1, 1], [], []>} : vector<1x256xbf16>, vector<256x128xbf16>, vector<1x128xf32> -> vector<1x128xf32>
    %83 = arith.addf %82, %76 : vector<1x128xf32>
    %cst_52 = arith.constant dense<0.000000e+00> : vector<1xf32>
    %84 = vector.multi_reduction <add>, %83, %cst_52 [1] : vector<1x128xf32> to vector<1xf32>
    %85 = vector.shape_cast %84 : vector<1xf32> to vector<1x1xf32>
    %cst_53 = arith.constant 1.280000e+02 : f32
    %86 = vector.broadcast %cst_53 : f32 to vector<1x1xf32>
    %87 = arith.divf %85, %86 : vector<1x1xf32>
    %88 = vector.broadcast %87 : vector<1x1xf32> to vector<1x128xf32>
    %89 = arith.subf %83, %88 : vector<1x128xf32>
    %90 = arith.mulf %89, %89 : vector<1x128xf32>
    %cst_54 = arith.constant dense<0.000000e+00> : vector<1xf32>
    %91 = vector.multi_reduction <add>, %90, %cst_54 [1] : vector<1x128xf32> to vector<1xf32>
    %92 = vector.shape_cast %91 : vector<1xf32> to vector<1x1xf32>
    %cst_55 = arith.constant 1.280000e+02 : f32
    %93 = vector.broadcast %cst_55 : f32 to vector<1x1xf32>
    %94 = arith.divf %92, %93 : vector<1x1xf32>
    %cst_56 = arith.constant 9.99999974E-6 : f32
    %95 = vector.broadcast %cst_56 : f32 to vector<1x1xf32>
    %96 = arith.addf %94, %95 : vector<1x1xf32>
    %97 = math.rsqrt %96 : vector<1x1xf32>
    %98 = vector.broadcast %97 : vector<1x1xf32> to vector<1x128xf32>
    %99 = arith.mulf %89, %98 : vector<1x128xf32>
    %100 = arith.mulf %99, %77 : vector<1x128xf32>
    %101 = arith.addf %100, %78 : vector<1x128xf32>
    %c0_57 = arith.constant 0 : index
    %c0_58 = arith.constant 0 : index
    %c0_59 = arith.constant 0 : index
    %102 = vector.load %arg12[%c0_57, %c0_58, %c0_59] : memref<1x197x128xf32, #tpu.memory_space<vmem>>, vector<1x1x128xf32>
    %103 = vector.shape_cast %102 : vector<1x1x128xf32> to vector<1x128xf32>
    %104 = vector.shape_cast %101 : vector<1x128xf32> to vector<1x1x128xf32>
    tpu.vector_store %arg12[%c0_57, %c0_58, %c0_59], %104 {strides = array<i32>} : memref<1x197x128xf32, #tpu.memory_space<vmem>>, vector<1x1x128xf32>,
    %c0_60 = arith.constant 0 : index
    %c0_61 = arith.constant 0 : index
    %c0_62 = arith.constant 0 : index
    %105 = vector.load %arg4[%c0_60, %c0_61, %c0_62] : memref<1x196x256xbf16, #tpu.memory_space<vmem>>, vector<1x196x256xbf16>
    %106 = vector.shape_cast %105 : vector<1x196x256xbf16> to vector<196x256xbf16>
    %c0_63 = arith.constant 0 : index
    %c0_64 = arith.constant 0 : index
    %107 = vector.load %arg9[%c0_63, %c0_64] : memref<256x128xbf16, #tpu.memory_space<vmem>>, vector<256x128xbf16>
    %cst_65 = arith.constant dense<0.000000e+00> : vector<196x128xf32>
    %108 = tpu.matmul %106, %107, %cst_65 {dimension_numbers = #tpu.dot_dimension_numbers<[1], [0], [0], [1], [0, 0, 1, 1], [], []>} : vector<196x256xbf16>, vector<256x128xbf16>, vector<196x128xf32> -> vector<196x128xf32>
    %109 = vector.broadcast %76 : vector<1x128xf32> to vector<196x128xf32>
    %110 = arith.addf %108, %109 : vector<196x128xf32>
    %cst_66 = arith.constant dense<0.000000e+00> : vector<196xf32>
    %111 = vector.multi_reduction <add>, %110, %cst_66 [1] : vector<196x128xf32> to vector<196xf32>
    %112 = vector.shape_cast %111 : vector<196xf32> to vector<196x1xf32>
    %cst_67 = arith.constant 1.280000e+02 : f32
    %113 = vector.broadcast %cst_67 : f32 to vector<196x1xf32>
    %114 = arith.divf %112, %113 : vector<196x1xf32>
    %115 = vector.broadcast %114 : vector<196x1xf32> to vector<196x128xf32>
    %116 = arith.subf %110, %115 : vector<196x128xf32>
    %117 = arith.mulf %116, %116 : vector<196x128xf32>
    %cst_68 = arith.constant dense<0.000000e+00> : vector<196xf32>
    %118 = vector.multi_reduction <add>, %117, %cst_68 [1] : vector<196x128xf32> to vector<196xf32>
    %119 = vector.shape_cast %118 : vector<196xf32> to vector<196x1xf32>
    %cst_69 = arith.constant 1.280000e+02 : f32
    %120 = vector.broadcast %cst_69 : f32 to vector<196x1xf32>
    %121 = arith.divf %119, %120 : vector<196x1xf32>
    %cst_70 = arith.constant 9.99999974E-6 : f32
    %122 = vector.broadcast %cst_70 : f32 to vector<196x1xf32>
    %123 = arith.addf %121, %122 : vector<196x1xf32>
    %124 = math.rsqrt %123 : vector<196x1xf32>
    %125 = vector.broadcast %124 : vector<196x1xf32> to vector<196x128xf32>
    %126 = arith.mulf %116, %125 : vector<196x128xf32>
    %127 = vector.broadcast %77 : vector<1x128xf32> to vector<196x128xf32>
    %128 = arith.mulf %126, %127 : vector<196x128xf32>
    %129 = vector.broadcast %78 : vector<1x128xf32> to vector<196x128xf32>
    %130 = arith.addf %128, %129 : vector<196x128xf32>
    %c0_71 = arith.constant 0 : index
    %c1_72 = arith.constant 1 : index
    %c0_73 = arith.constant 0 : index
    %131 = vector.load %arg12[%c0_71, %c1_72, %c0_73] : memref<1x197x128xf32, #tpu.memory_space<vmem>>, vector<1x196x128xf32>
    %132 = vector.shape_cast %131 : vector<1x196x128xf32> to vector<196x128xf32>
    %133 = vector.shape_cast %130 : vector<196x128xf32> to vector<1x196x128xf32>
    tpu.vector_store %arg12[%c0_71, %c1_72, %c0_73], %133 {strides = array<i32>} : memref<1x197x128xf32, #tpu.memory_space<vmem>>, vector<1x196x128xf32>,
    return
  }
  func.func @transform_0(%arg0: i32) -> (i32, i32, i32) {
    %c0_i32 = arith.constant 0 : i32
    %c0_i32_0 = arith.constant 0 : i32
    %c0_i32_1 = arith.constant 0 : i32
    return %arg0, %c0_i32, %c0_i32_0 : i32, i32, i32
  }
  func.func @transform_1(%arg0: i32) -> (i32, i32, i32) {
    %c0_i32 = arith.constant 0 : i32
    %c0_i32_0 = arith.constant 0 : i32
    %c0_i32_1 = arith.constant 0 : i32
    return %arg0, %c0_i32, %c0_i32_0 : i32, i32, i32
  }
  func.func @transform_2(%arg0: i32) -> (i32, i32, i32) {
    %c0_i32 = arith.constant 0 : i32
    %c0_i32_0 = arith.constant 0 : i32
    %c0_i32_1 = arith.constant 0 : i32
    return %arg0, %c0_i32, %c0_i32_0 : i32, i32, i32
  }
  func.func @transform_3(%arg0: i32) -> (i32, i32, i32) {
    %c0_i32 = arith.constant 0 : i32
    %c0_i32_0 = arith.constant 0 : i32
    %c0_i32_1 = arith.constant 0 : i32
    return %arg0, %c0_i32, %c0_i32_0 : i32, i32, i32
  }
  func.func @transform_4(%arg0: i32) -> (i32, i32) {
    %c0_i32 = arith.constant 0 : i32
    %c0_i32_0 = arith.constant 0 : i32
    %c0_i32_1 = arith.constant 0 : i32
    return %c0_i32, %c0_i32_0 : i32, i32
  }
  func.func @transform_5(%arg0: i32) -> (i32, i32) {
    %c0_i32 = arith.constant 0 : i32
    %c0_i32_0 = arith.constant 0 : i32
    %c0_i32_1 = arith.constant 0 : i32
    return %c0_i32, %c0_i32_0 : i32, i32
  }
  func.func @transform_6(%arg0: i32) -> (i32, i32) {
    %c0_i32 = arith.constant 0 : i32
    %c0_i32_0 = arith.constant 0 : i32
    %c0_i32_1 = arith.constant 0 : i32
    return %c0_i32, %c0_i32_0 : i32, i32
  }
  func.func @transform_7(%arg0: i32) -> (i32, i32) {
    %c0_i32 = arith.constant 0 : i32
    %c0_i32_0 = arith.constant 0 : i32
    %c0_i32_1 = arith.constant 0 : i32
    return %c0_i32, %c0_i32_0 : i32, i32
  }
  func.func @transform_8(%arg0: i32) -> (i32, i32) {
    %c0_i32 = arith.constant 0 : i32
    %c0_i32_0 = arith.constant 0 : i32
    %c0_i32_1 = arith.constant 0 : i32
    return %c0_i32, %c0_i32_0 : i32, i32
  }
  func.func @transform_9(%arg0: i32) -> (i32, i32) {
    %c0_i32 = arith.constant 0 : i32
    %c0_i32_0 = arith.constant 0 : i32
    %c0_i32_1 = arith.constant 0 : i32
    return %c0_i32, %c0_i32_0 : i32, i32
  }
  func.func @transform_10(%arg0: i32) -> (i32, i32, i32) {
    %c0_i32 = arith.constant 0 : i32
    %c0_i32_0 = arith.constant 0 : i32
    %c0_i32_1 = arith.constant 0 : i32
    return %arg0, %c0_i32, %c0_i32_0 : i32, i32, i32
  }
  func.func @transform_11(%arg0: i32) -> (i32, i32, i32) {
    %c0_i32 = arith.constant 0 : i32
    %c0_i32_0 = arith.constant 0 : i32
    %c0_i32_1 = arith.constant 0 : i32
    return %arg0, %c0_i32, %c0_i32_0 : i32, i32, i32
  }
}

</mosaic_0001>

<llo_original>
// kernel: tile_tokenizer_forward.1
$region0: #{tile_tokenizer_forward.1}
  #allocation0 [shape = 'u32[]', space=smem, size = 0x4, offset = 0x4, fixed_abs, tag = 'smem constant byte address 0x4 - core index']
  #allocation1 [shape = 'u32[144,128]{1,0:T(1,128)}', space=vmem, size = 0x12000, scoped, tag = 'internal scratch']
  %s0 = inlined_call_operand.vmem [shape: bf16[2,5,256], index: 0, kind: input, shape index: {}]
  %s1 = inlined_call_operand.vmem [shape: bf16[2,5,256], index: 1, kind: input, shape index: {}]
  %s2 = inlined_call_operand.vmem [shape: bf16[2,1,256], index: 2, kind: input, shape index: {}]
  %s3 = inlined_call_operand.vmem [shape: bf16[2,196,256], index: 3, kind: input, shape index: {}]
  %s4 = inlined_call_operand.vmem [shape: bf16[256,128], index: 4, kind: input, shape index: {}]
  %s5 = inlined_call_operand.vmem [shape: bf16[256,128], index: 5, kind: input, shape index: {}]
  %s6 = inlined_call_operand.vmem [shape: bf16[256,256], index: 6, kind: input, shape index: {}]
  %s7 = inlined_call_operand.vmem [shape: bf16[256,128], index: 7, kind: input, shape index: {}]
  %s8 = inlined_call_operand.vmem [shape: bf16[256,128], index: 8, kind: input, shape index: {}]
  %s9 = inlined_call_operand.vmem [shape: f32[8,256], index: 9, kind: input, shape index: {}]
  %s10 = inlined_call_operand.hbm [shape: f32[2,5,128], index: 10, kind: output, shape index: {0}]
  %s11 = inlined_call_operand.hbm [shape: f32[2,197,128], index: 11, kind: output, shape index: {1}]
  %12 = xla_tuple %s10, %s11
  %s13 = sld [smem:[#allocation0]]
  $region81: #{tile_tokenizer_forward.1} parent=0
    _
  %s15 = ssub.s32 1, %s13
  %s16 = scalar_select 0, %s15, %s13
  $region1: #{tile_tokenizer_forward.1} parent=0
    #allocation2 [shape = 'u8[8192]{0}', space=vmem, size = 0x2000, scoped, tag = 'output window, operand 0']
    #allocation3 [shape = 's32[2]{0}', space=sflag, size = 0x8, scoped, tag = 'scoped memory for tile_tokenizer_forward.1']
    #allocation4 [shape = 'u8[204800]{0}', space=vmem, size = 0x32000, scoped, tag = 'output window, operand 1']
    #allocation5 [shape = 's32[2]{0}', space=sflag, size = 0x8, scoped, tag = 'scoped memory for tile_tokenizer_forward.1']
    %17 = vsyncpa [#allocation3], 0
    %s18 = scalar_lea.sflag [#allocation3], 1
    %19 = vsyncpa %s18, 0
    %20 = vsyncpa [#allocation5], 0
    %s21 = scalar_lea.sflag [#allocation5], 1
    %22 = vsyncpa %s21, 0
    loop: start=0, step=1, limit=4
    $region2: #{tile_tokenizer_forward.1} parent=1 // loop_pre_header
      _
    $region3: #{tile_tokenizer_forward.1} parent=1 // loop_header
      %s24 = sphi 0, %s28
      %p25 = scmp.ge.s32.totalorder %s24, 4
      %s34 = sphi 0, %s36
      %s37 = sphi 0, %s34
      %s38 = sphi 0, %s37
      %s54 = sphi 0, %s38
      %s60 = sphi 0, %s62
      %s63 = sphi 0, %s60
      %s64 = sphi 0, %s63
      %s80 = sphi 0, %s64
      %s86 = sphi 0, %s88
      %s89 = sphi 0, %s86
      %s90 = sphi 0, %s89
      %s106 = sphi 0, %s90
      %s112 = sphi 0, %s114
      %s115 = sphi 0, %s112
      %s116 = sphi 0, %s115
      %s132 = sphi 0, %s116
      %s136 = sphi 0, %s136
      %s138 = sphi 0, %s136
      %s139 = sphi 0, %s138
      %s153 = sphi 0, %s139
      %s157 = sphi 0, %s157
      %s159 = sphi 0, %s157
      %s160 = sphi 0, %s159
      %s174 = sphi 0, %s160
      %s178 = sphi 0, %s178
      %s180 = sphi 0, %s178
      %s181 = sphi 0, %s180
      %s195 = sphi 0, %s181
      %s199 = sphi 0, %s199
      %s201 = sphi 0, %s199
      %s202 = sphi 0, %s201
      %s216 = sphi 0, %s202
      %s220 = sphi 0, %s220
      %s222 = sphi 0, %s220
      %s223 = sphi 0, %s222
      %s237 = sphi 0, %s223
      %s241 = sphi 0, %s241
      %s243 = sphi 0, %s241
      %s244 = sphi 0, %s243
      %s258 = sphi 0, %s244
      %s264 = sphi 0, %s266
      %s267 = sphi 0, %s264
      %s268 = sphi 0, %s267
      %s284 = sphi 0, %s268
      %s290 = sphi 0, %s292
      %s293 = sphi 0, %s290
      %s294 = sphi 0, %s293
      %s310 = sphi 0, %s294
    $region4: #{tile_tokenizer_forward.1} parent=1 // loop_header_branch
      %27 = sbr.rel (%p25) target = $region8
    $region5: #{tile_tokenizer_forward.1} parent=1 // loop_body
      %s29 = ssub.s32 %s24, 1
      %s30 = ssub.s32 %s24, 2
      %s31 = sadd.s32 %s24, 1
      %s32 = ssub.s32 %s24, %s31
      %p33 = scmp.eq.s32.totalorder %s32, 0
      %s35 = sadd.s32 %s34, 1
      %s36 = scalar_select %p33, %s34, %s35
      %p39 = pneg %p33
      %p40 = scmp.eq.s32.totalorder %s24, 1
      %p41 = por %p39, %p40
      %p42 = scmp.ne.s32.totalorder %s34, %s37
      %p43 = scmp.eq.s32.totalorder %s24, 0
      %p44 = por %p42, %p43
      %p45 = scmp.ne.s32.totalorder %s34, %s37
      %p46 = scmp.eq.s32.totalorder %s29, 1
      %p47 = por %p45, %p46
      %p48 = scmp.ne.s32.totalorder %s37, %s38
      %p49 = scmp.eq.s32.totalorder %s29, 0
      %p50 = por %p48, %p49
      %p51 = scmp.ne.s32.totalorder %s37, %s38
      %p52 = scmp.eq.s32.totalorder %s30, 1
      %p53 = por %p51, %p52
      %p55 = scmp.ne.s32.totalorder %s38, %s54
      %p56 = scmp.eq.s32.totalorder %s30, 0
      %p57 = por %p55, %p56
      %s58 = ssub.s32 %s24, %s31
      %p59 = scmp.eq.s32.totalorder %s58, 0
      %s61 = sadd.s32 %s60, 1
      %s62 = scalar_select %p59, %s60, %s61
      %p65 = pneg %p59
      %p66 = scmp.eq.s32.totalorder %s24, 1
      %p67 = por %p65, %p66
      %p68 = scmp.ne.s32.totalorder %s60, %s63
      %p69 = scmp.eq.s32.totalorder %s24, 0
      %p70 = por %p68, %p69
      %p71 = scmp.ne.s32.totalorder %s60, %s63
      %p72 = scmp.eq.s32.totalorder %s29, 1
      %p73 = por %p71, %p72
      %p74 = scmp.ne.s32.totalorder %s63, %s64
      %p75 = scmp.eq.s32.totalorder %s29, 0
      %p76 = por %p74, %p75
      %p77 = scmp.ne.s32.totalorder %s63, %s64
      %p78 = scmp.eq.s32.totalorder %s30, 1
      %p79 = por %p77, %p78
      %p81 = scmp.ne.s32.totalorder %s64, %s80
      %p82 = scmp.eq.s32.totalorder %s30, 0
      %p83 = por %p81, %p82
      %s84 = ssub.s32 %s24, %s31
      %p85 = scmp.eq.s32.totalorder %s84, 0
      %s87 = sadd.s32 %s86, 1
      %s88 = scalar_select %p85, %s86, %s87
      %p91 = pneg %p85
      %p92 = scmp.eq.s32.totalorder %s24, 1
      %p93 = por %p91, %p92
      %p94 = scmp.ne.s32.totalorder %s86, %s89
      %p95 = scmp.eq.s32.totalorder %s24, 0
      %p96 = por %p94, %p95
      %p97 = scmp.ne.s32.totalorder %s86, %s89
      %p98 = scmp.eq.s32.totalorder %s29, 1
      %p99 = por %p97, %p98
      %p100 = scmp.ne.s32.totalorder %s89, %s90
      %p101 = scmp.eq.s32.totalorder %s29, 0
      %p102 = por %p100, %p101
      %p103 = scmp.ne.s32.totalorder %s89, %s90
      %p104 = scmp.eq.s32.totalorder %s30, 1
      %p105 = por %p103, %p104
      %p107 = scmp.ne.s32.totalorder %s90, %s106
      %p108 = scmp.eq.s32.totalorder %s30, 0
      %p109 = por %p107, %p108
      %s110 = ssub.s32 %s24, %s31
      %p111 = scmp.eq.s32.totalorder %s110, 0
      %s113 = sadd.s32 %s112, 1
      %s114 = scalar_select %p111, %s112, %s113
      %p117 = pneg %p111
      %p118 = scmp.eq.s32.totalorder %s24, 1
      %p119 = por %p117, %p118
      %p120 = scmp.ne.s32.totalorder %s112, %s115
      %p121 = scmp.eq.s32.totalorder %s24, 0
      %p122 = por %p120, %p121
      %p123 = scmp.ne.s32.totalorder %s112, %s115
      %p124 = scmp.eq.s32.totalorder %s29, 1
      %p125 = por %p123, %p124
      %p126 = scmp.ne.s32.totalorder %s115, %s116
      %p127 = scmp.eq.s32.totalorder %s29, 0
      %p128 = por %p126, %p127
      %p129 = scmp.ne.s32.totalorder %s115, %s116
      %p130 = scmp.eq.s32.totalorder %s30, 1
      %p131 = por %p129, %p130
      %p133 = scmp.ne.s32.totalorder %s116, %s132
      %p134 = scmp.eq.s32.totalorder %s30, 0
      %p135 = por %p133, %p134
      %s137 = sadd.s32 %s136, 1
      %p140 = scmp.eq.s32.totalorder %s24, 1
      %p141 = scmp.ne.s32.totalorder %s136, %s138
      %p142 = scmp.eq.s32.totalorder %s24, 0
      %p143 = por %p141, %p142
      %p144 = scmp.ne.s32.totalorder %s136, %s138
      %p145 = scmp.eq.s32.totalorder %s29, 1
      %p146 = por %p144, %p145
      %p147 = scmp.ne.s32.totalorder %s138, %s139
      %p148 = scmp.eq.s32.totalorder %s29, 0
      %p149 = por %p147, %p148
      %p150 = scmp.ne.s32.totalorder %s138, %s139
      %p151 = scmp.eq.s32.totalorder %s30, 1
      %p152 = por %p150, %p151
      %p154 = scmp.ne.s32.totalorder %s139, %s153
      %p155 = scmp.eq.s32.totalorder %s30, 0
      %p156 = por %p154, %p155
      %s158 = sadd.s32 %s157, 1
      %p161 = scmp.eq.s32.totalorder %s24, 1
      %p162 = scmp.ne.s32.totalorder %s157, %s159
      %p163 = scmp.eq.s32.totalorder %s24, 0
      %p164 = por %p162, %p163
      %p165 = scmp.ne.s32.totalorder %s157, %s159
      %p166 = scmp.eq.s32.totalorder %s29, 1
      %p167 = por %p165, %p166
      %p168 = scmp.ne.s32.totalorder %s159, %s160
      %p169 = scmp.eq.s32.totalorder %s29, 0
      %p170 = por %p168, %p169
      %p171 = scmp.ne.s32.totalorder %s159, %s160
      %p172 = scmp.eq.s32.totalorder %s30, 1
      %p173 = por %p171, %p172
      %p175 = scmp.ne.s32.totalorder %s160, %s174
      %p176 = scmp.eq.s32.totalorder %s30, 0
      %p177 = por %p175, %p176
      %s179 = sadd.s32 %s178, 1
      %p182 = scmp.eq.s32.totalorder %s24, 1
      %p183 = scmp.ne.s32.totalorder %s178, %s180
      %p184 = scmp.eq.s32.totalorder %s24, 0
      %p185 = por %p183, %p184
      %p186 = scmp.ne.s32.totalorder %s178, %s180
      %p187 = scmp.eq.s32.totalorder %s29, 1
      %p188 = por %p186, %p187
      %p189 = scmp.ne.s32.totalorder %s180, %s181
      %p190 = scmp.eq.s32.totalorder %s29, 0
      %p191 = por %p189, %p190
      %p192 = scmp.ne.s32.totalorder %s180, %s181
      %p193 = scmp.eq.s32.totalorder %s30, 1
      %p194 = por %p192, %p193
      %p196 = scmp.ne.s32.totalorder %s181, %s195
      %p197 = scmp.eq.s32.totalorder %s30, 0
      %p198 = por %p196, %p197
      %s200 = sadd.s32 %s199, 1
      %p203 = scmp.eq.s32.totalorder %s24, 1
      %p204 = scmp.ne.s32.totalorder %s199, %s201
      %p205 = scmp.eq.s32.totalorder %s24, 0
      %p206 = por %p204, %p205
      %p207 = scmp.ne.s32.totalorder %s199, %s201
      %p208 = scmp.eq.s32.totalorder %s29, 1
      %p209 = por %p207, %p208
      %p210 = scmp.ne.s32.totalorder %s201, %s202
      %p211 = scmp.eq.s32.totalorder %s29, 0
      %p212 = por %p210, %p211
      %p213 = scmp.ne.s32.totalorder %s201, %s202
      %p214 = scmp.eq.s32.totalorder %s30, 1
      %p215 = por %p213, %p214
      %p217 = scmp.ne.s32.totalorder %s202, %s216
      %p218 = scmp.eq.s32.totalorder %s30, 0
      %p219 = por %p217, %p218
      %s221 = sadd.s32 %s220, 1
      %p224 = scmp.eq.s32.totalorder %s24, 1
      %p225 = scmp.ne.s32.totalorder %s220, %s222
      %p226 = scmp.eq.s32.totalorder %s24, 0
      %p227 = por %p225, %p226
      %p228 = scmp.ne.s32.totalorder %s220, %s222
      %p229 = scmp.eq.s32.totalorder %s29, 1
      %p230 = por %p228, %p229
      %p231 = scmp.ne.s32.totalorder %s222, %s223
      %p232 = scmp.eq.s32.totalorder %s29, 0
      %p233 = por %p231, %p232
      %p234 = scmp.ne.s32.totalorder %s222, %s223
      %p235 = scmp.eq.s32.totalorder %s30, 1
      %p236 = por %p234, %p235
      %p238 = scmp.ne.s32.totalorder %s223, %s237
      %p239 = scmp.eq.s32.totalorder %s30, 0
      %p240 = por %p238, %p239
      %s242 = sadd.s32 %s241, 1
      %p245 = scmp.eq.s32.totalorder %s24, 1
      %p246 = scmp.ne.s32.totalorder %s241, %s243
      %p247 = scmp.eq.s32.totalorder %s24, 0
      %p248 = por %p246, %p247
      %p249 = scmp.ne.s32.totalorder %s241, %s243
      %p250 = scmp.eq.s32.totalorder %s29, 1
      %p251 = por %p249, %p250
      %p252 = scmp.ne.s32.totalorder %s243, %s244
      %p253 = scmp.eq.s32.totalorder %s29, 0
      %p254 = por %p252, %p253
      %p255 = scmp.ne.s32.totalorder %s243, %s244
      %p256 = scmp.eq.s32.totalorder %s30, 1
      %p257 = por %p255, %p256
      %p259 = scmp.ne.s32.totalorder %s244, %s258
      %p260 = scmp.eq.s32.totalorder %s30, 0
      %p261 = por %p259, %p260
      %s262 = ssub.s32 %s24, %s31
      %p263 = scmp.eq.s32.totalorder %s262, 0
      %s265 = sadd.s32 %s264, 1
      %s266 = scalar_select %p263, %s264, %s265
      %p269 = pneg %p263
      %p270 = scmp.eq.s32.totalorder %s24, 1
      %p271 = por %p269, %p270
      %p272 = scmp.ne.s32.totalorder %s264, %s267
      %p273 = scmp.eq.s32.totalorder %s24, 0
      %p274 = por %p272, %p273
      %p275 = scmp.ne.s32.totalorder %s264, %s267
      %p276 = scmp.eq.s32.totalorder %s29, 1
      %p277 = por %p275, %p276
      %p278 = scmp.ne.s32.totalorder %s267, %s268
      %p279 = scmp.eq.s32.totalorder %s29, 0
      %p280 = por %p278, %p279
      %p281 = scmp.ne.s32.totalorder %s267, %s268
      %p282 = scmp.eq.s32.totalorder %s30, 1
      %p283 = por %p281, %p282
      %p285 = scmp.ne.s32.totalorder %s268, %s284
      %p286 = scmp.eq.s32.totalorder %s30, 0
      %p287 = por %p285, %p286
      %s288 = ssub.s32 %s24, %s31
      %p289 = scmp.eq.s32.totalorder %s288, 0
      %s291 = sadd.s32 %s290, 1
      %s292 = scalar_select %p289, %s290, %s291
      %p295 = pneg %p289
      %p296 = scmp.eq.s32.totalorder %s24, 1
      %p297 = por %p295, %p296
      %p298 = scmp.ne.s32.totalorder %s290, %s293
      %p299 = scmp.eq.s32.totalorder %s24, 0
      %p300 = por %p298, %p299
      %p301 = scmp.ne.s32.totalorder %s290, %s293
      %p302 = scmp.eq.s32.totalorder %s29, 1
      %p303 = por %p301, %p302
      %p304 = scmp.ne.s32.totalorder %s293, %s294
      %p305 = scmp.eq.s32.totalorder %s29, 0
      %p306 = por %p304, %p305
      %p307 = scmp.ne.s32.totalorder %s293, %s294
      %p308 = scmp.eq.s32.totalorder %s30, 1
      %p309 = por %p307, %p308
      %p311 = scmp.ne.s32.totalorder %s294, %s310
      %p312 = scmp.eq.s32.totalorder %s30, 0
      %p313 = por %p311, %p312
      %p314 = scmp.le.s32.totalorder 1, %s24
      %p315 = scmp.lt.s32.totalorder %s24, 3
      %p316 = pnand %p314, %p315
      %p317 = pneg %p316
      // Predicated region
      $region9: #{tile_tokenizer_forward.1} parent=5 // pred_check
        _
      $region10: #{tile_tokenizer_forward.1} parent=5 // pred_check_branch
        %319 = sbr.rel (%p316) target = $region12
      $region11: #{tile_tokenizer_forward.1} parent=5 // pred_region
        %s320 = ssub.s32 %s24, 1
        // Predicated region
        $region13: #{tile_tokenizer_forward.1} parent=11 // pred_check
          %p321 = pneg %p149
        $region14: #{tile_tokenizer_forward.1} parent=11 // pred_check_branch
          %323 = sbr.rel (%p321) target = $region16
        $region15: #{tile_tokenizer_forward.1} parent=11 // pred_region
          _
        $region16: #{tile_tokenizer_forward.1} parent=11 // pred_fallthru
          _
        // Predicated region
        $region17: #{tile_tokenizer_forward.1} parent=11 // pred_check
          %p324 = pneg %p170
        $region18: #{tile_tokenizer_forward.1} parent=11 // pred_check_branch
          %326 = sbr.rel (%p324) target = $region20
        $region19: #{tile_tokenizer_forward.1} parent=11 // pred_region
          _
        $region20: #{tile_tokenizer_forward.1} parent=11 // pred_fallthru
          _
        // Predicated region
        $region21: #{tile_tokenizer_forward.1} parent=11 // pred_check
          %p327 = pneg %p191
        $region22: #{tile_tokenizer_forward.1} parent=11 // pred_check_branch
          %329 = sbr.rel (%p327) target = $region24
        $region23: #{tile_tokenizer_forward.1} parent=11 // pred_region
          _
        $region24: #{tile_tokenizer_forward.1} parent=11 // pred_fallthru
          _
        // Predicated region
        $region25: #{tile_tokenizer_forward.1} parent=11 // pred_check
          %p330 = pneg %p212
        $region26: #{tile_tokenizer_forward.1} parent=11 // pred_check_branch
          %332 = sbr.rel (%p330) target = $region28
        $region27: #{tile_tokenizer_forward.1} parent=11 // pred_region
          _
        $region28: #{tile_tokenizer_forward.1} parent=11 // pred_fallthru
          _
        // Predicated region
        $region29: #{tile_tokenizer_forward.1} parent=11 // pred_check
          %p333 = pneg %p233
        $region30: #{tile_tokenizer_forward.1} parent=11 // pred_check_branch
          %335 = sbr.rel (%p333) target = $region32
        $region31: #{tile_tokenizer_forward.1} parent=11 // pred_region
          _
        $region32: #{tile_tokenizer_forward.1} parent=11 // pred_fallthru
          _
        // Predicated region
        $region33: #{tile_tokenizer_forward.1} parent=11 // pred_check
          %p336 = pneg %p254
        $region34: #{tile_tokenizer_forward.1} parent=11 // pred_check_branch
          %338 = sbr.rel (%p336) target = $region36
        $region35: #{tile_tokenizer_forward.1} parent=11 // pred_region
          _
        $region36: #{tile_tokenizer_forward.1} parent=11 // pred_fallthru
          _
      $region12: #{tile_tokenizer_forward.1} parent=5 // pred_fallthru
        _
      %p339 = scmp.lt.s32.totalorder %s24, 2
      // Predicated region
      $region37: #{tile_tokenizer_forward.1} parent=5 // pred_check
        %p340 = pneg %p339
      $region38: #{tile_tokenizer_forward.1} parent=5 // pred_check_branch
        %342 = sbr.rel (%p340) target = $region40
      $region39: #{tile_tokenizer_forward.1} parent=5 // pred_region
        // Predicated region
        $region41: #{tile_tokenizer_forward.1} parent=39 // pred_check
          %p343 = pneg %p44
        $region42: #{tile_tokenizer_forward.1} parent=39 // pred_check_branch
          %345 = sbr.rel (%p343) target = $region44
        $region43: #{tile_tokenizer_forward.1} parent=39 // pred_region
          %p346 = scmp.lt.s32.totalorder %s24, 1
          %s347 = scalar_select %p346, %s24, 1
          %s348 = smul.addr %s347, 2
          %s349 = smul.addr %s348, 4
          %s350 = scalar_lea.vmem %s0, %s349
        $region44: #{tile_tokenizer_forward.1} parent=39 // pred_fallthru
          _
        // Predicated region
        $region45: #{tile_tokenizer_forward.1} parent=39 // pred_check
          %p351 = pneg %p70
        $region46: #{tile_tokenizer_forward.1} parent=39 // pred_check_branch
          %353 = sbr.rel (%p351) target = $region48
        $region47: #{tile_tokenizer_forward.1} parent=39 // pred_region
          %p354 = scmp.lt.s32.totalorder %s24, 1
          %s355 = scalar_select %p354, %s24, 1
          %s356 = smul.addr %s355, 2
          %s357 = smul.addr %s356, 4
          %s358 = scalar_lea.vmem %s1, %s357
        $region48: #{tile_tokenizer_forward.1} parent=39 // pred_fallthru
          _
        // Predicated region
        $region49: #{tile_tokenizer_forward.1} parent=39 // pred_check
          %p359 = pneg %p96
        $region50: #{tile_tokenizer_forward.1} parent=39 // pred_check_branch
          %361 = sbr.rel (%p359) target = $region52
        $region51: #{tile_tokenizer_forward.1} parent=39 // pred_region
          %p362 = scmp.lt.s32.totalorder %s24, 1
          %s363 = scalar_select %p362, %s24, 1
          %s364 = smul.addr %s363, 2
          %s365 = scalar_lea.vmem %s2, %s364
        $region52: #{tile_tokenizer_forward.1} parent=39 // pred_fallthru
          _
        // Predicated region
        $region53: #{tile_tokenizer_forward.1} parent=39 // pred_check
          %p366 = pneg %p122
        $region54: #{tile_tokenizer_forward.1} parent=39 // pred_check_branch
          %368 = sbr.rel (%p366) target = $region56
        $region55: #{tile_tokenizer_forward.1} parent=39 // pred_region
          %p369 = scmp.lt.s32.totalorder %s24, 1
          %s370 = scalar_select %p369, %s24, 1
          %s371 = smul.addr %s370, 50
          %s372 = smul.addr %s371, 4
          %s373 = scalar_lea.vmem %s3, %s372
        $region56: #{tile_tokenizer_forward.1} parent=39 // pred_fallthru
          _
      $region40: #{tile_tokenizer_forward.1} parent=5 // pred_fallthru
        _
      %p374 = scmp.le.s32.totalorder 1, %s24
      %p375 = scmp.lt.s32.totalorder %s24, 3
      %p376 = pnand %p374, %p375
      %p377 = pneg %p376
      // Predicated region
      $region57: #{tile_tokenizer_forward.1} parent=5 // pred_check
        _
      $region58: #{tile_tokenizer_forward.1} parent=5 // pred_check_branch
        %379 = sbr.rel (%p376) target = $region60
      $region59: #{tile_tokenizer_forward.1} parent=5 // pred_region
        %s380 = ssub.s32 %s24, 1
        %p381 = scmp.lt.s32.totalorder %s29, 1
        %s382 = scalar_select %p381, %s29, 1
        %s383 = smul.addr %s382, 2
        %s384 = smul.addr %s383, 4
        %s385 = scalar_lea.vmem %s0, %s384
        %p386 = pneg %p50
        %p387 = pneg %p47
        %p388 = scmp.lt.s32.totalorder %s29, 1
        %s389 = scalar_select %p388, %s29, 1
        %s390 = smul.addr %s389, 2
        %s391 = smul.addr %s390, 4
        %s392 = scalar_lea.vmem %s1, %s391
        %p393 = pneg %p76
        %p394 = pneg %p73
        %p395 = scmp.lt.s32.totalorder %s29, 1
        %s396 = scalar_select %p395, %s29, 1
        %s397 = smul.addr %s396, 2
        %s398 = scalar_lea.vmem %s2, %s397
        %p399 = pneg %p102
        %p400 = pneg %p99
        %p401 = scmp.lt.s32.totalorder %s29, 1
        %s402 = scalar_select %p401, %s29, 1
        %s403 = smul.addr %s402, 50
        %s404 = smul.addr %s403, 4
        %s405 = scalar_lea.vmem %s3, %s404
        %p406 = pneg %p128
        %p407 = pneg %p125
        %p408 = pneg %p149
        %p409 = pneg %p146
        %p410 = pneg %p170
        %p411 = pneg %p167
        %p412 = pneg %p191
        %p413 = pneg %p188
        %p414 = pneg %p212
        %p415 = pneg %p209
        %p416 = pneg %p233
        %p417 = pneg %p230
        %p418 = pneg %p254
        %p419 = pneg %p251
        %p420 = pneg %p280
        %p421 = pneg %p277
        %s422 = sand.u32 %s267, 1
        %s423 = scalar_lea.sflag [#allocation3], %s422
        %s424 = sand.u32 %s267, 1
        %s425 = smul.addr %s424, 8
        %s426 = scalar_lea.vmem [#allocation2], %s425
        %p427 = pneg %p306
        %p428 = pneg %p303
        %s429 = sand.u32 %s293, 1
        %s430 = scalar_lea.sflag [#allocation5], %s429
        %s431 = sand.u32 %s293, 1
        %s432 = smul.addr %s431, 200
        %s433 = scalar_lea.vmem [#allocation4], %s432
        %p434 = scmp.lt.s32.totalorder %s29, 1
        %s435 = scalar_select %p434, %s29, 1
        %s436 = smul.addr %s435, 2
        %s437 = smul.addr %s436, 4
        %s438 = scalar_lea.vmem %s0, %s437
        %p439 = scmp.lt.s32.totalorder %s29, 1
        %s440 = scalar_select %p439, %s29, 1
        %s441 = smul.addr %s440, 2
        %s442 = smul.addr %s441, 4
        %s443 = scalar_lea.vmem %s1, %s442
        %p444 = scmp.lt.s32.totalorder %s29, 1
        %s445 = scalar_select %p444, %s29, 1
        %s446 = smul.addr %s445, 2
        %s447 = scalar_lea.vmem %s2, %s446
        %p448 = scmp.lt.s32.totalorder %s29, 1
        %s449 = scalar_select %p448, %s29, 1
        %s450 = smul.addr %s449, 50
        %s451 = smul.addr %s450, 4
        %s452 = scalar_lea.vmem %s3, %s451
        %v454 = vld [vmem:[%s438] sm:$0x77]
        %v455 = vld [vmem:[%s4] sm:$0xf]
        %v456 = vld [vmem:[%s4 + $0x4] sm:$0xf]
        %v457 = vld [vmem:[%s4 + $0x8] sm:$0xf]
        %v458 = vld [vmem:[%s4 + $0xc] sm:$0xf]
        %v459 = vld [vmem:[%s4 + $0x10] sm:$0xf]
        %v460 = vld [vmem:[%s4 + $0x14] sm:$0xf]
        %v461 = vld [vmem:[%s4 + $0x18] sm:$0xf]
        %v462 = vld [vmem:[%s4 + $0x1c] sm:$0xf]
        %v463 = vld [vmem:[%s4 + $0x20] sm:$0xf]
        %v464 = vld [vmem:[%s4 + $0x24] sm:$0xf]
        %v465 = vld [vmem:[%s4 + $0x28] sm:$0xf]
        %v466 = vld [vmem:[%s4 + $0x2c] sm:$0xf]
        %v467 = vld [vmem:[%s4 + $0x30] sm:$0xf]
        %v468 = vld [vmem:[%s4 + $0x34] sm:$0xf]
        %v469 = vld [vmem:[%s4 + $0x38] sm:$0xf]
        %v470 = vld [vmem:[%s4 + $0x3c] sm:$0xf]
        %v471 = vld [vmem:[%s4 + $0x40] sm:$0xf]
        %v472 = vld [vmem:[%s4 + $0x44] sm:$0xf]
        %v473 = vld [vmem:[%s4 + $0x48] sm:$0xf]
        %v474 = vld [vmem:[%s4 + $0x4c] sm:$0xf]
        %v475 = vld [vmem:[%s4 + $0x50] sm:$0xf]
        %v476 = vld [vmem:[%s4 + $0x54] sm:$0xf]
        %v477 = vld [vmem:[%s4 + $0x58] sm:$0xf]
        %v478 = vld [vmem:[%s4 + $0x5c] sm:$0xf]
        %v479 = vld [vmem:[%s4 + $0x60] sm:$0xf]
        %v480 = vld [vmem:[%s4 + $0x64] sm:$0xf]
        %v481 = vld [vmem:[%s4 + $0x68] sm:$0xf]
        %v482 = vld [vmem:[%s4 + $0x6c] sm:$0xf]
        %v483 = vld [vmem:[%s4 + $0x70] sm:$0xf]
        %v484 = vld [vmem:[%s4 + $0x74] sm:$0xf]
        %v485 = vld [vmem:[%s4 + $0x78] sm:$0xf]
        %v486 = vld [vmem:[%s4 + $0x7c] sm:$0xf]
        %v487 = vld [vmem:[%s9] ss:$0 sm:$0xff]
        %v489 = vunpack.c.l.b16 %v454
        %v490 = vunpack.c.h.b16 %v454
        %v491 = vpack.c.b16 %v489, %v489
        %v492 = vpack.c.b16 %v490, %v490
        %v527 = vunpack.c.l.b16 %v455
        %v528 = vunpack.c.l.b16 %v456
        %v529 = vunpack.c.l.b16 %v457
        %v530 = vunpack.c.l.b16 %v458
        %v531 = vunpack.c.l.b16 %v459
        %v532 = vunpack.c.l.b16 %v460
        %v533 = vunpack.c.l.b16 %v461
        %v534 = vunpack.c.l.b16 %v462
        %v535 = vunpack.c.l.b16 %v463
        %v536 = vunpack.c.l.b16 %v464
        %v537 = vunpack.c.l.b16 %v465
        %v538 = vunpack.c.l.b16 %v466
        %v539 = vunpack.c.l.b16 %v467
        %v540 = vunpack.c.l.b16 %v468
        %v541 = vunpack.c.l.b16 %v469
        %v542 = vunpack.c.l.b16 %v470
        %v543 = vunpack.c.l.b16 %v471
        %v544 = vunpack.c.l.b16 %v472
        %v545 = vunpack.c.l.b16 %v473
        %v546 = vunpack.c.l.b16 %v474
        %v547 = vunpack.c.l.b16 %v475
        %v548 = vunpack.c.l.b16 %v476
        %v549 = vunpack.c.l.b16 %v477
        %v550 = vunpack.c.l.b16 %v478
        %v551 = vunpack.c.l.b16 %v479
        %v552 = vunpack.c.l.b16 %v480
        %v553 = vunpack.c.l.b16 %v481
        %v554 = vunpack.c.l.b16 %v482
        %v555 = vunpack.c.l.b16 %v483
        %v556 = vunpack.c.l.b16 %v484
        %v557 = vunpack.c.l.b16 %v485
        %v558 = vunpack.c.l.b16 %v486
        %v559 = vpack.c.b16 %v528, %v527
        %v560 = vpack.c.b16 %v530, %v529
        %v561 = vpack.c.b16 %v532, %v531
        %v562 = vpack.c.b16 %v534, %v533
        %v563 = vpack.c.b16 %v536, %v535
        %v564 = vpack.c.b16 %v538, %v537
        %v565 = vpack.c.b16 %v540, %v539
        %v566 = vpack.c.b16 %v542, %v541
        %v567 = vpack.c.b16 %v544, %v543
        %v568 = vpack.c.b16 %v546, %v545
        %v569 = vpack.c.b16 %v548, %v547
        %v570 = vpack.c.b16 %v550, %v549
        %v571 = vpack.c.b16 %v552, %v551
        %v572 = vpack.c.b16 %v554, %v553
        %v573 = vpack.c.b16 %v556, %v555
        %v574 = vpack.c.b16 %v558, %v557
        %591 = vmatprep.subr.bf16.mxu0 0
        %592 = vmatpush1.bf16.msra.mxu0 %v559
        %593 = vmatprep.subr.bf16.mxu0 0
        %594 = vmatpush1.bf16.msra.mxu0 %v560
        %595 = vmatprep.subr.bf16.mxu0 0
        %596 = vmatpush1.bf16.msra.mxu0 %v561
        %597 = vmatprep.subr.bf16.mxu0 0
        %598 = vmatpush1.bf16.msra.mxu0 %v562
        %599 = vmatprep.subr.bf16.mxu0 0
        %600 = vmatpush1.bf16.msra.mxu0 %v563
        %601 = vmatprep.subr.bf16.mxu0 0
        %602 = vmatpush1.bf16.msra.mxu0 %v564
        %603 = vmatprep.subr.bf16.mxu0 0
        %604 = vmatpush1.bf16.msra.mxu0 %v565
        %605 = vmatprep.subr.bf16.mxu0 0
        %606 = vmatpush1.bf16.msra.mxu0 %v566
        %607 = vmatprep.subr.bf16.mxu0 0
        %608 = vmatpush1.bf16.msra.mxu0 %v567
        %609 = vmatprep.subr.bf16.mxu0 0
        %610 = vmatpush1.bf16.msra.mxu0 %v568
        %611 = vmatprep.subr.bf16.mxu0 0
        %612 = vmatpush1.bf16.msra.mxu0 %v569
        %613 = vmatprep.subr.bf16.mxu0 0
        %614 = vmatpush1.bf16.msra.mxu0 %v570
        %615 = vmatprep.subr.bf16.mxu0 0
        %616 = vmatpush1.bf16.msra.mxu0 %v571
        %617 = vmatprep.subr.bf16.mxu0 0
        %618 = vmatpush1.bf16.msra.mxu0 %v572
        %619 = vmatprep.subr.bf16.mxu0 0
        %620 = vmatpush1.bf16.msra.mxu0 %v573
        %621 = vmatprep.subr.bf16.mxu0 0
        %622 = vmatpush1.bf16.msra.mxu0 %v574
        %623 = vmatprep.mubr.bf16.mxu0 %v492
        %624 = vmatmul.mubr.bf16.gmra.mrb[0].mxu0 %v491
        %v625 = vpop.f32.mrb[0].mxu0
        %v626 = vadd.f32 %v487, %v625
        %v627 = vpop.f32.mrb[0].mxu0
        %v628 = vpop.f32.mrb[0].mxu0
        %v629 = vpop.f32.mrb[0].mxu0
        %630 = vdwg.mxu0
        %v631 = vld [vmem:[%s9 + $0x1] ss:$0 sm:$0xff]
        %v632 = vld [vmem:[%s9 + $0x2] ss:$0 sm:$0xff]
        %vm633 = vcmask 1044480
        %v634 = vsel %vm633, %v626, 0.0
        %635 = vadd.xlane.f32.xlu0 %v634
        %v636 = vpop.xlane.xlu0 %635
        %v637 = vrcp.pop 128.0
        %v638 = vmul.f32 %v636, %v637
        %v639 = vsub.f32 %v626, %v638
        %v640 = vmul.f32 %v639, %v639
        %v641 = vsel %vm633, %v640, 0.0
        %642 = vadd.xlane.f32.xlu0 %v641
        %v643 = vpop.xlane.xlu0 %642
        %v644 = vmul.f32 %v643, %v637
        %v645 = vadd.f32 %v644, 1e-05
        %v646 = vrsqrt.pop %v645
        %v647 = vmul.f32 %v639, %v646
        %v648 = vmul.f32 %v647, %v631
        %v649 = vadd.f32 %v648, %v632
        %v650 = vld [vmem:[%s443] sm:$0x77]
        %v651 = vld [vmem:[%s5] sm:$0xf]
        %v652 = vld [vmem:[%s5 + $0x4] sm:$0xf]
        %v653 = vld [vmem:[%s5 + $0x8] sm:$0xf]
        %v654 = vld [vmem:[%s5 + $0xc] sm:$0xf]
        %v655 = vld [vmem:[%s5 + $0x10] sm:$0xf]
        %v656 = vld [vmem:[%s5 + $0x14] sm:$0xf]
        %v657 = vld [vmem:[%s5 + $0x18] sm:$0xf]
        %v658 = vld [vmem:[%s5 + $0x1c] sm:$0xf]
        %v659 = vld [vmem:[%s5 + $0x20] sm:$0xf]
        %v660 = vld [vmem:[%s5 + $0x24] sm:$0xf]
        %v661 = vld [vmem:[%s5 + $0x28] sm:$0xf]
        %v662 = vld [vmem:[%s5 + $0x2c] sm:$0xf]
        %v663 = vld [vmem:[%s5 + $0x30] sm:$0xf]
        %v664 = vld [vmem:[%s5 + $0x34] sm:$0xf]
        %v665 = vld [vmem:[%s5 + $0x38] sm:$0xf]
        %v666 = vld [vmem:[%s5 + $0x3c] sm:$0xf]
        %v667 = vld [vmem:[%s5 + $0x40] sm:$0xf]
        %v668 = vld [vmem:[%s5 + $0x44] sm:$0xf]
        %v669 = vld [vmem:[%s5 + $0x48] sm:$0xf]
        %v670 = vld [vmem:[%s5 + $0x4c] sm:$0xf]
        %v671 = vld [vmem:[%s5 + $0x50] sm:$0xf]
        %v672 = vld [vmem:[%s5 + $0x54] sm:$0xf]
        %v673 = vld [vmem:[%s5 + $0x58] sm:$0xf]
        %v674 = vld [vmem:[%s5 + $0x5c] sm:$0xf]
        %v675 = vld [vmem:[%s5 + $0x60] sm:$0xf]
        %v676 = vld [vmem:[%s5 + $0x64] sm:$0xf]
        %v677 = vld [vmem:[%s5 + $0x68] sm:$0xf]
        %v678 = vld [vmem:[%s5 + $0x6c] sm:$0xf]
        %v679 = vld [vmem:[%s5 + $0x70] sm:$0xf]
        %v680 = vld [vmem:[%s5 + $0x74] sm:$0xf]
        %v681 = vld [vmem:[%s5 + $0x78] sm:$0xf]
        %v682 = vld [vmem:[%s5 + $0x7c] sm:$0xf]
        %v683 = vld [vmem:[%s9 + $0x8] ss:$0 sm:$0xff]
        %v685 = vunpack.c.l.b16 %v650
        %v686 = vunpack.c.h.b16 %v650
        %v687 = vpack.c.b16 %v685, %v685
        %v688 = vpack.c.b16 %v686, %v686
        %v723 = vunpack.c.l.b16 %v651
        %v724 = vunpack.c.l.b16 %v652
        %v725 = vunpack.c.l.b16 %v653
        %v726 = vunpack.c.l.b16 %v654
        %v727 = vunpack.c.l.b16 %v655
        %v728 = vunpack.c.l.b16 %v656
        %v729 = vunpack.c.l.b16 %v657
        %v730 = vunpack.c.l.b16 %v658
        %v731 = vunpack.c.l.b16 %v659
        %v732 = vunpack.c.l.b16 %v660
        %v733 = vunpack.c.l.b16 %v661
        %v734 = vunpack.c.l.b16 %v662
        %v735 = vunpack.c.l.b16 %v663
        %v736 = vunpack.c.l.b16 %v664
        %v737 = vunpack.c.l.b16 %v665
        %v738 = vunpack.c.l.b16 %v666
        %v739 = vunpack.c.l.b16 %v667
        %v740 = vunpack.c.l.b16 %v668
        %v741 = vunpack.c.l.b16 %v669
        %v742 = vunpack.c.l.b16 %v670
        %v743 = vunpack.c.l.b16 %v671
        %v744 = vunpack.c.l.b16 %v672
        %v745 = vunpack.c.l.b16 %v673
        %v746 = vunpack.c.l.b16 %v674
        %v747 = vunpack.c.l.b16 %v675
        %v748 = vunpack.c.l.b16 %v676
        %v749 = vunpack.c.l.b16 %v677
        %v750 = vunpack.c.l.b16 %v678
        %v751 = vunpack.c.l.b16 %v679
        %v752 = vunpack.c.l.b16 %v680
        %v753 = vunpack.c.l.b16 %v681
        %v754 = vunpack.c.l.b16 %v682
        %v755 = vpack.c.b16 %v724, %v723
        %v756 = vpack.c.b16 %v726, %v725
        %v757 = vpack.c.b16 %v728, %v727
        %v758 = vpack.c.b16 %v730, %v729
        %v759 = vpack.c.b16 %v732, %v731
        %v760 = vpack.c.b16 %v734, %v733
        %v761 = vpack.c.b16 %v736, %v735
        %v762 = vpack.c.b16 %v738, %v737
        %v763 = vpack.c.b16 %v740, %v739
        %v764 = vpack.c.b16 %v742, %v741
        %v765 = vpack.c.b16 %v744, %v743
        %v766 = vpack.c.b16 %v746, %v745
        %v767 = vpack.c.b16 %v748, %v747
        %v768 = vpack.c.b16 %v750, %v749
        %v769 = vpack.c.b16 %v752, %v751
        %v770 = vpack.c.b16 %v754, %v753
        %787 = vmatprep.subr.bf16.mxu0 0
        %788 = vmatpush1.bf16.msra.mxu0 %v755
        %789 = vmatprep.subr.bf16.mxu0 0
        %790 = vmatpush1.bf16.msra.mxu0 %v756
        %791 = vmatprep.subr.bf16.mxu0 0
        %792 = vmatpush1.bf16.msra.mxu0 %v757
        %793 = vmatprep.subr.bf16.mxu0 0
        %794 = vmatpush1.bf16.msra.mxu0 %v758
        %795 = vmatprep.subr.bf16.mxu0 0
        %796 = vmatpush1.bf16.msra.mxu0 %v759
        %797 = vmatprep.subr.bf16.mxu0 0
        %798 = vmatpush1.bf16.msra.mxu0 %v760
        %799 = vmatprep.subr.bf16.mxu0 0
        %800 = vmatpush1.bf16.msra.mxu0 %v761
        %801 = vmatprep.subr.bf16.mxu0 0
        %802 = vmatpush1.bf16.msra.mxu0 %v762
        %803 = vmatprep.subr.bf16.mxu0 0
        %804 = vmatpush1.bf16.msra.mxu0 %v763
        %805 = vmatprep.subr.bf16.mxu0 0
        %806 = vmatpush1.bf16.msra.mxu0 %v764
        %807 = vmatprep.subr.bf16.mxu0 0
        %808 = vmatpush1.bf16.msra.mxu0 %v765
        %809 = vmatprep.subr.bf16.mxu0 0
        %810 = vmatpush1.bf16.msra.mxu0 %v766
        %811 = vmatprep.subr.bf16.mxu0 0
        %812 = vmatpush1.bf16.msra.mxu0 %v767
        %813 = vmatprep.subr.bf16.mxu0 0
        %814 = vmatpush1.bf16.msra.mxu0 %v768
        %815 = vmatprep.subr.bf16.mxu0 0
        %816 = vmatpush1.bf16.msra.mxu0 %v769
        %817 = vmatprep.subr.bf16.mxu0 0
        %818 = vmatpush1.bf16.msra.mxu0 %v770
        %819 = vmatprep.mubr.bf16.mxu0 %v688
        %820 = vmatmul.mubr.bf16.gmra.mrb[0].mxu0 %v687
        %v821 = vpop.f32.mrb[0].mxu0
        %v822 = vadd.f32 %v683, %v821
        %v823 = vpop.f32.mrb[0].mxu0
        %v824 = vpop.f32.mrb[0].mxu0
        %v825 = vpop.f32.mrb[0].mxu0
        %826 = vdwg.mxu0
        %v827 = vld [vmem:[%s9 + $0x9] ss:$0 sm:$0xff]
        %v828 = vld [vmem:[%s9 + $0xa] ss:$0 sm:$0xff]
        %v829 = vsel %vm633, %v822, 0.0
        %830 = vadd.xlane.f32.xlu0 %v829
        %v831 = vpop.xlane.xlu0 %830
        %v832 = vmul.f32 %v831, %v637
        %v833 = vsub.f32 %v822, %v832
        %v834 = vmul.f32 %v833, %v833
        %v835 = vsel %vm633, %v834, 0.0
        %836 = vadd.xlane.f32.xlu0 %v835
        %v837 = vpop.xlane.xlu0 %836
        %v838 = vmul.f32 %v837, %v637
        %v839 = vadd.f32 %v838, 1e-05
        %v840 = vrsqrt.pop %v839
        %v841 = vmul.f32 %v833, %v840
        %v842 = vmul.f32 %v841, %v827
        %v843 = vadd.f32 %v842, %v828
        %v844 = vpack.c.bf16 %v649, %v649
        %v845 = vpack.c.bf16 %v843, %v843
        %v846 = vld [vmem:[%s6] sm:$0xff]
        %v847 = vld [vmem:[%s6 + $0x8] sm:$0xff]
        %v848 = vld [vmem:[%s6 + $0x10] sm:$0xff]
        %v849 = vld [vmem:[%s6 + $0x18] sm:$0xff]
        %v850 = vld [vmem:[%s6 + $0x20] sm:$0xff]
        %v851 = vld [vmem:[%s6 + $0x28] sm:$0xff]
        %v852 = vld [vmem:[%s6 + $0x30] sm:$0xff]
        %v853 = vld [vmem:[%s6 + $0x38] sm:$0xff]
        %v854 = vld [vmem:[%s6 + $0x40] sm:$0xff]
        %v855 = vld [vmem:[%s6 + $0x48] sm:$0xff]
        %v856 = vld [vmem:[%s6 + $0x50] sm:$0xff]
        %v857 = vld [vmem:[%s6 + $0x58] sm:$0xff]
        %v858 = vld [vmem:[%s6 + $0x60] sm:$0xff]
        %v859 = vld [vmem:[%s6 + $0x68] sm:$0xff]
        %v860 = vld [vmem:[%s6 + $0x70] sm:$0xff]
        %v861 = vld [vmem:[%s6 + $0x78] sm:$0xff]
        %v862 = vld [vmem:[%s6 + $0x80] sm:$0xff]
        %v863 = vld [vmem:[%s6 + $0x88] sm:$0xff]
        %v864 = vld [vmem:[%s6 + $0x90] sm:$0xff]
        %v865 = vld [vmem:[%s6 + $0x98] sm:$0xff]
        %v866 = vld [vmem:[%s6 + $0xa0] sm:$0xff]
        %v867 = vld [vmem:[%s6 + $0xa8] sm:$0xff]
        %v868 = vld [vmem:[%s6 + $0xb0] sm:$0xff]
        %v869 = vld [vmem:[%s6 + $0xb8] sm:$0xff]
        %v870 = vld [vmem:[%s6 + $0xc0] sm:$0xff]
        %v871 = vld [vmem:[%s6 + $0xc8] sm:$0xff]
        %v872 = vld [vmem:[%s6 + $0xd0] sm:$0xff]
        %v873 = vld [vmem:[%s6 + $0xd8] sm:$0xff]
        %v874 = vld [vmem:[%s6 + $0xe0] sm:$0xff]
        %v875 = vld [vmem:[%s6 + $0xe8] sm:$0xff]
        %v876 = vld [vmem:[%s6 + $0xf0] sm:$0xff]
        %v877 = vld [vmem:[%s6 + $0xf8] sm:$0xff]
        %s878 = scalar_lea.vmem %s9, 3
        %v879 = vld [vmem:[%s878] ss:$8 sm:$0x3]
        %v881 = vlaneseq
        %v882 = vshrl.u32 %v881, 7
        %v883 = vsub.s32 0, %v882
        %v884 = vrot.slane %v879, %v883
        %v885 = vlaneseq
        %v886 = vshrl.u32 %v885, 7
        %v887 = vsub.s32 1, %v886
        %v888 = vrot.slane %v879, %v887
        %v923 = vunpack.c.l.b16 %v846
        %v924 = vunpack.c.h.b16 %v846
        %v925 = vunpack.c.l.b16 %v847
        %v926 = vunpack.c.h.b16 %v847
        %v927 = vunpack.c.l.b16 %v848
        %v928 = vunpack.c.h.b16 %v848
        %v929 = vunpack.c.l.b16 %v849
        %v930 = vunpack.c.h.b16 %v849
        %v931 = vunpack.c.l.b16 %v850
        %v932 = vunpack.c.h.b16 %v850
        %v933 = vunpack.c.l.b16 %v851
        %v934 = vunpack.c.h.b16 %v851
        %v935 = vunpack.c.l.b16 %v852
        %v936 = vunpack.c.h.b16 %v852
        %v937 = vunpack.c.l.b16 %v853
        %v938 = vunpack.c.h.b16 %v853
        %v939 = vunpack.c.l.b16 %v854
        %v940 = vunpack.c.h.b16 %v854
        %v941 = vunpack.c.l.b16 %v855
        %v942 = vunpack.c.h.b16 %v855
        %v943 = vunpack.c.l.b16 %v856
        %v944 = vunpack.c.h.b16 %v856
        %v945 = vunpack.c.l.b16 %v857
        %v946 = vunpack.c.h.b16 %v857
        %v947 = vunpack.c.l.b16 %v858
        %v948 = vunpack.c.h.b16 %v858
        %v949 = vunpack.c.l.b16 %v859
        %v950 = vunpack.c.h.b16 %v859
        %v951 = vunpack.c.l.b16 %v860
        %v952 = vunpack.c.h.b16 %v860
        %v953 = vunpack.c.l.b16 %v861
        %v954 = vunpack.c.h.b16 %v861
        %v955 = vunpack.c.l.b16 %v862
        %v956 = vunpack.c.h.b16 %v862
        %v957 = vunpack.c.l.b16 %v863
        %v958 = vunpack.c.h.b16 %v863
        %v959 = vunpack.c.l.b16 %v864
        %v960 = vunpack.c.h.b16 %v864
        %v961 = vunpack.c.l.b16 %v865
        %v962 = vunpack.c.h.b16 %v865
        %v963 = vunpack.c.l.b16 %v866
        %v964 = vunpack.c.h.b16 %v866
        %v965 = vunpack.c.l.b16 %v867
        %v966 = vunpack.c.h.b16 %v867
        %v967 = vunpack.c.l.b16 %v868
        %v968 = vunpack.c.h.b16 %v868
        %v969 = vunpack.c.l.b16 %v869
        %v970 = vunpack.c.h.b16 %v869
        %v971 = vunpack.c.l.b16 %v870
        %v972 = vunpack.c.h.b16 %v870
        %v973 = vunpack.c.l.b16 %v871
        %v974 = vunpack.c.h.b16 %v871
        %v975 = vunpack.c.l.b16 %v872
        %v976 = vunpack.c.h.b16 %v872
        %v977 = vunpack.c.l.b16 %v873
        %v978 = vunpack.c.h.b16 %v873
        %v979 = vunpack.c.l.b16 %v874
        %v980 = vunpack.c.h.b16 %v874
        %v981 = vunpack.c.l.b16 %v875
        %v982 = vunpack.c.h.b16 %v875
        %v983 = vunpack.c.l.b16 %v876
        %v984 = vunpack.c.h.b16 %v876
        %v985 = vunpack.c.l.b16 %v877
        %v986 = vunpack.c.h.b16 %v877
        %v987 = vpack.c.b16 %v925, %v923
        %v988 = vpack.c.b16 %v926, %v924
        %v989 = vpack.c.b16 %v929, %v927
        %v990 = vpack.c.b16 %v930, %v928
        %v991 = vpack.c.b16 %v933, %v931
        %v992 = vpack.c.b16 %v934, %v932
        %v993 = vpack.c.b16 %v937, %v935
        %v994 = vpack.c.b16 %v938, %v936
        %v995 = vpack.c.b16 %v941, %v939
        %v996 = vpack.c.b16 %v942, %v940
        %v997 = vpack.c.b16 %v945, %v943
        %v998 = vpack.c.b16 %v946, %v944
        %v999 = vpack.c.b16 %v949, %v947
        %v1000 = vpack.c.b16 %v950, %v948
        %v1001 = vpack.c.b16 %v953, %v951
        %v1002 = vpack.c.b16 %v954, %v952
        %v1003 = vpack.c.b16 %v957, %v955
        %v1004 = vpack.c.b16 %v958, %v956
        %v1005 = vpack.c.b16 %v961, %v959
        %v1006 = vpack.c.b16 %v962, %v960
        %v1007 = vpack.c.b16 %v965, %v963
        %v1008 = vpack.c.b16 %v966, %v964
        %v1009 = vpack.c.b16 %v969, %v967
        %v1010 = vpack.c.b16 %v970, %v968
        %v1011 = vpack.c.b16 %v973, %v971
        %v1012 = vpack.c.b16 %v974, %v972
        %v1013 = vpack.c.b16 %v977, %v975
        %v1014 = vpack.c.b16 %v978, %v976
        %v1015 = vpack.c.b16 %v981, %v979
        %v1016 = vpack.c.b16 %v982, %v980
        %v1017 = vpack.c.b16 %v985, %v983
        %v1018 = vpack.c.b16 %v986, %v984
        %1051 = vmatprep.subr.bf16.mxu0 %v988
        %1052 = vmatpush1.bf16.msra.mxu0 %v987
        %1053 = vmatprep.subr.bf16.mxu0 %v990
        %1054 = vmatpush1.bf16.msra.mxu0 %v989
        %1055 = vmatprep.subr.bf16.mxu0 %v992
        %1056 = vmatpush1.bf16.msra.mxu0 %v991
        %1057 = vmatprep.subr.bf16.mxu0 %v994
        %1058 = vmatpush1.bf16.msra.mxu0 %v993
        %1059 = vmatprep.subr.bf16.mxu0 %v996
        %1060 = vmatpush1.bf16.msra.mxu0 %v995
        %1061 = vmatprep.subr.bf16.mxu0 %v998
        %1062 = vmatpush1.bf16.msra.mxu0 %v997
        %1063 = vmatprep.subr.bf16.mxu0 %v1000
        %1064 = vmatpush1.bf16.msra.mxu0 %v999
        %1065 = vmatprep.subr.bf16.mxu0 %v1002
        %1066 = vmatpush1.bf16.msra.mxu0 %v1001
        %1067 = vmatprep.subr.bf16.mxu0 %v1004
        %1068 = vmatpush1.bf16.msra.mxu0 %v1003
        %1069 = vmatprep.subr.bf16.mxu0 %v1006
        %1070 = vmatpush1.bf16.msra.mxu0 %v1005
        %1071 = vmatprep.subr.bf16.mxu0 %v1008
        %1072 = vmatpush1.bf16.msra.mxu0 %v1007
        %1073 = vmatprep.subr.bf16.mxu0 %v1010
        %1074 = vmatpush1.bf16.msra.mxu0 %v1009
        %1075 = vmatprep.subr.bf16.mxu0 %v1012
        %1076 = vmatpush1.bf16.msra.mxu0 %v1011
        %1077 = vmatprep.subr.bf16.mxu0 %v1014
        %1078 = vmatpush1.bf16.msra.mxu0 %v1013
        %1079 = vmatprep.subr.bf16.mxu0 %v1016
        %1080 = vmatpush1.bf16.msra.mxu0 %v1015
        %1081 = vmatprep.subr.bf16.mxu0 %v1018
        %1082 = vmatpush1.bf16.msra.mxu0 %v1017
        %1083 = vmatprep.mubr.bf16.mxu0 %v845
        %1084 = vmatmul.mubr.bf16.gmra.mrb[0].mxu0 %v844
        %v1085 = vpop.f32.mrb[0].mxu0
        %v1086 = vadd.f32 %v884, %v1085
        %v1087 = vpop.f32.mrb[0].mxu0
        %v1088 = vadd.f32 %v888, %v1087
        %v1089 = vpop.f32.mrb[0].mxu0
        %v1090 = vpop.f32.mrb[0].mxu0
        %1091 = vdwg.mxu0
        %v1092 = vmax.f32 %v1086, 0.0
        %v1093 = vmax.f32 %v1088, 0.0
        %v1094 = vpack.c.bf16 %v1092, %v1092
        %v1095 = vpack.c.bf16 %v1093, %v1093
        %v1096 = vld [vmem:[%s7] sm:$0xf]
        %v1097 = vld [vmem:[%s7 + $0x4] sm:$0xf]
        %v1098 = vld [vmem:[%s7 + $0x8] sm:$0xf]
        %v1099 = vld [vmem:[%s7 + $0xc] sm:$0xf]
        %v1100 = vld [vmem:[%s7 + $0x10] sm:$0xf]
        %v1101 = vld [vmem:[%s7 + $0x14] sm:$0xf]
        %v1102 = vld [vmem:[%s7 + $0x18] sm:$0xf]
        %v1103 = vld [vmem:[%s7 + $0x1c] sm:$0xf]
        %v1104 = vld [vmem:[%s7 + $0x20] sm:$0xf]
        %v1105 = vld [vmem:[%s7 + $0x24] sm:$0xf]
        %v1106 = vld [vmem:[%s7 + $0x28] sm:$0xf]
        %v1107 = vld [vmem:[%s7 + $0x2c] sm:$0xf]
        %v1108 = vld [vmem:[%s7 + $0x30] sm:$0xf]
        %v1109 = vld [vmem:[%s7 + $0x34] sm:$0xf]
        %v1110 = vld [vmem:[%s7 + $0x38] sm:$0xf]
        %v1111 = vld [vmem:[%s7 + $0x3c] sm:$0xf]
        %v1112 = vld [vmem:[%s7 + $0x40] sm:$0xf]
        %v1113 = vld [vmem:[%s7 + $0x44] sm:$0xf]
        %v1114 = vld [vmem:[%s7 + $0x48] sm:$0xf]
        %v1115 = vld [vmem:[%s7 + $0x4c] sm:$0xf]
        %v1116 = vld [vmem:[%s7 + $0x50] sm:$0xf]
        %v1117 = vld [vmem:[%s7 + $0x54] sm:$0xf]
        %v1118 = vld [vmem:[%s7 + $0x58] sm:$0xf]
        %v1119 = vld [vmem:[%s7 + $0x5c] sm:$0xf]
        %v1120 = vld [vmem:[%s7 + $0x60] sm:$0xf]
        %v1121 = vld [vmem:[%s7 + $0x64] sm:$0xf]
        %v1122 = vld [vmem:[%s7 + $0x68] sm:$0xf]
        %v1123 = vld [vmem:[%s7 + $0x6c] sm:$0xf]
        %v1124 = vld [vmem:[%s7 + $0x70] sm:$0xf]
        %v1125 = vld [vmem:[%s7 + $0x74] sm:$0xf]
        %v1126 = vld [vmem:[%s7 + $0x78] sm:$0xf]
        %v1127 = vld [vmem:[%s7 + $0x7c] sm:$0xf]
        %v1128 = vld [vmem:[%s9 + $0x4] ss:$0 sm:$0xff]
        %v1161 = vunpack.c.l.b16 %v1096
        %v1162 = vunpack.c.l.b16 %v1097
        %v1163 = vunpack.c.l.b16 %v1098
        %v1164 = vunpack.c.l.b16 %v1099
        %v1165 = vunpack.c.l.b16 %v1100
        %v1166 = vunpack.c.l.b16 %v1101
        %v1167 = vunpack.c.l.b16 %v1102
        %v1168 = vunpack.c.l.b16 %v1103
        %v1169 = vunpack.c.l.b16 %v1104
        %v1170 = vunpack.c.l.b16 %v1105
        %v1171 = vunpack.c.l.b16 %v1106
        %v1172 = vunpack.c.l.b16 %v1107
        %v1173 = vunpack.c.l.b16 %v1108
        %v1174 = vunpack.c.l.b16 %v1109
        %v1175 = vunpack.c.l.b16 %v1110
        %v1176 = vunpack.c.l.b16 %v1111
        %v1177 = vunpack.c.l.b16 %v1112
        %v1178 = vunpack.c.l.b16 %v1113
        %v1179 = vunpack.c.l.b16 %v1114
        %v1180 = vunpack.c.l.b16 %v1115
        %v1181 = vunpack.c.l.b16 %v1116
        %v1182 = vunpack.c.l.b16 %v1117
        %v1183 = vunpack.c.l.b16 %v1118
        %v1184 = vunpack.c.l.b16 %v1119
        %v1185 = vunpack.c.l.b16 %v1120
        %v1186 = vunpack.c.l.b16 %v1121
        %v1187 = vunpack.c.l.b16 %v1122
        %v1188 = vunpack.c.l.b16 %v1123
        %v1189 = vunpack.c.l.b16 %v1124
        %v1190 = vunpack.c.l.b16 %v1125
        %v1191 = vunpack.c.l.b16 %v1126
        %v1192 = vunpack.c.l.b16 %v1127
        %v1193 = vpack.c.b16 %v1162, %v1161
        %v1194 = vpack.c.b16 %v1164, %v1163
        %v1195 = vpack.c.b16 %v1166, %v1165
        %v1196 = vpack.c.b16 %v1168, %v1167
        %v1197 = vpack.c.b16 %v1170, %v1169
        %v1198 = vpack.c.b16 %v1172, %v1171
        %v1199 = vpack.c.b16 %v1174, %v1173
        %v1200 = vpack.c.b16 %v1176, %v1175
        %v1201 = vpack.c.b16 %v1178, %v1177
        %v1202 = vpack.c.b16 %v1180, %v1179
        %v1203 = vpack.c.b16 %v1182, %v1181
        %v1204 = vpack.c.b16 %v1184, %v1183
        %v1205 = vpack.c.b16 %v1186, %v1185
        %v1206 = vpack.c.b16 %v1188, %v1187
        %v1207 = vpack.c.b16 %v1190, %v1189
        %v1208 = vpack.c.b16 %v1192, %v1191
        %1225 = vmatprep.subr.bf16.mxu0 0
        %1226 = vmatpush1.bf16.msra.mxu0 %v1193
        %1227 = vmatprep.subr.bf16.mxu0 0
        %1228 = vmatpush1.bf16.msra.mxu0 %v1194
        %1229 = vmatprep.subr.bf16.mxu0 0
        %1230 = vmatpush1.bf16.msra.mxu0 %v1195
        %1231 = vmatprep.subr.bf16.mxu0 0
        %1232 = vmatpush1.bf16.msra.mxu0 %v1196
        %1233 = vmatprep.subr.bf16.mxu0 0
        %1234 = vmatpush1.bf16.msra.mxu0 %v1197
        %1235 = vmatprep.subr.bf16.mxu0 0
        %1236 = vmatpush1.bf16.msra.mxu0 %v1198
        %1237 = vmatprep.subr.bf16.mxu0 0
        %1238 = vmatpush1.bf16.msra.mxu0 %v1199
        %1239 = vmatprep.subr.bf16.mxu0 0
        %1240 = vmatpush1.bf16.msra.mxu0 %v1200
        %1241 = vmatprep.subr.bf16.mxu0 0
        %1242 = vmatpush1.bf16.msra.mxu0 %v1201
        %1243 = vmatprep.subr.bf16.mxu0 0
        %1244 = vmatpush1.bf16.msra.mxu0 %v1202
        %1245 = vmatprep.subr.bf16.mxu0 0
        %1246 = vmatpush1.bf16.msra.mxu0 %v1203
        %1247 = vmatprep.subr.bf16.mxu0 0
        %1248 = vmatpush1.bf16.msra.mxu0 %v1204
        %1249 = vmatprep.subr.bf16.mxu0 0
        %1250 = vmatpush1.bf16.msra.mxu0 %v1205
        %1251 = vmatprep.subr.bf16.mxu0 0
        %1252 = vmatpush1.bf16.msra.mxu0 %v1206
        %1253 = vmatprep.subr.bf16.mxu0 0
        %1254 = vmatpush1.bf16.msra.mxu0 %v1207
        %1255 = vmatprep.subr.bf16.mxu0 0
        %1256 = vmatpush1.bf16.msra.mxu0 %v1208
        %1257 = vmatprep.mubr.bf16.mxu0 %v1095
        %1258 = vmatmul.mubr.bf16.gmra.mrb[0].mxu0 %v1094
        %v1259 = vpop.f32.mrb[0].mxu0
        %v1260 = vadd.f32 %v1128, %v1259
        %v1261 = vpop.f32.mrb[0].mxu0
        %v1262 = vpop.f32.mrb[0].mxu0
        %v1263 = vpop.f32.mrb[0].mxu0
        %1264 = vdwg.mxu0
        %1265 = vst [vmem:[%s426] sm:$0x1f] %v1260
        %v1266 = vld [vmem:[%s9 + $0xc] ss:$0 sm:$0xff]
        %v1267 = vld [vmem:[%s9 + $0x5] ss:$0 sm:$0xff]
        %v1268 = vld [vmem:[%s9 + $0xd] ss:$0 sm:$0xff]
        %v1269 = vld [vmem:[%s447] sm:$0x3]
        %v1270 = vld [vmem:[%s8] sm:$0xf]
        %v1271 = vld [vmem:[%s8 + $0x4] sm:$0xf]
        %v1272 = vld [vmem:[%s8 + $0x8] sm:$0xf]
        %v1273 = vld [vmem:[%s8 + $0xc] sm:$0xf]
        %v1274 = vld [vmem:[%s8 + $0x10] sm:$0xf]
        %v1275 = vld [vmem:[%s8 + $0x14] sm:$0xf]
        %v1276 = vld [vmem:[%s8 + $0x18] sm:$0xf]
        %v1277 = vld [vmem:[%s8 + $0x1c] sm:$0xf]
        %v1278 = vld [vmem:[%s8 + $0x20] sm:$0xf]
        %v1279 = vld [vmem:[%s8 + $0x24] sm:$0xf]
        %v1280 = vld [vmem:[%s8 + $0x28] sm:$0xf]
        %v1281 = vld [vmem:[%s8 + $0x2c] sm:$0xf]
        %v1282 = vld [vmem:[%s8 + $0x30] sm:$0xf]
        %v1283 = vld [vmem:[%s8 + $0x34] sm:$0xf]
        %v1284 = vld [vmem:[%s8 + $0x38] sm:$0xf]
        %v1285 = vld [vmem:[%s8 + $0x3c] sm:$0xf]
        %v1286 = vld [vmem:[%s8 + $0x40] sm:$0xf]
        %v1287 = vld [vmem:[%s8 + $0x44] sm:$0xf]
        %v1288 = vld [vmem:[%s8 + $0x48] sm:$0xf]
        %v1289 = vld [vmem:[%s8 + $0x4c] sm:$0xf]
        %v1290 = vld [vmem:[%s8 + $0x50] sm:$0xf]
        %v1291 = vld [vmem:[%s8 + $0x54] sm:$0xf]
        %v1292 = vld [vmem:[%s8 + $0x58] sm:$0xf]
        %v1293 = vld [vmem:[%s8 + $0x5c] sm:$0xf]
        %v1294 = vld [vmem:[%s8 + $0x60] sm:$0xf]
        %v1295 = vld [vmem:[%s8 + $0x64] sm:$0xf]
        %v1296 = vld [vmem:[%s8 + $0x68] sm:$0xf]
        %v1297 = vld [vmem:[%s8 + $0x6c] sm:$0xf]
        %v1298 = vld [vmem:[%s8 + $0x70] sm:$0xf]
        %v1299 = vld [vmem:[%s8 + $0x74] sm:$0xf]
        %v1300 = vld [vmem:[%s8 + $0x78] sm:$0xf]
        %v1301 = vld [vmem:[%s8 + $0x7c] sm:$0xf]
        %v1304 = vunpack.c.l.s4 1966171168
        %v1305 = vunpack.c.0.s8 %v1304
        %v1306 = vlaneseq
        %v1307 = vshrl.u32 %v1306, 7
        %v1308 = vsub.s32 %v1305, %v1307
        %v1309 = vrot.slane %v1269, %v1308
        %v1310 = vcombine.high %v1309, %v1309
        %v1312 = vunpack.c.l.s4 1966171168
        %v1313 = vunpack.c.0.s8 %v1312
        %v1314 = vlaneseq
        %v1315 = vshrl.u32 %v1314, 7
        %v1316 = vsub.s32 %v1313, %v1315
        %v1317 = vrot.slane %v1309, %v1316
        %v1319 = vunpack.c.l.s4 1966171168
        %v1320 = vunpack.c.0.s8 %v1319
        %v1321 = vlaneseq
        %v1322 = vshrl.u32 %v1321, 7
        %v1323 = vsub.s32 %v1320, %v1322
        %v1324 = vrot.slane %v1310, %v1323
        %v1359 = vunpack.c.l.b16 %v1270
        %v1360 = vunpack.c.l.b16 %v1271
        %v1361 = vunpack.c.l.b16 %v1272
        %v1362 = vunpack.c.l.b16 %v1273
        %v1363 = vunpack.c.l.b16 %v1274
        %v1364 = vunpack.c.l.b16 %v1275
        %v1365 = vunpack.c.l.b16 %v1276
        %v1366 = vunpack.c.l.b16 %v1277
        %v1367 = vunpack.c.l.b16 %v1278
        %v1368 = vunpack.c.l.b16 %v1279
        %v1369 = vunpack.c.l.b16 %v1280
        %v1370 = vunpack.c.l.b16 %v1281
        %v1371 = vunpack.c.l.b16 %v1282
        %v1372 = vunpack.c.l.b16 %v1283
        %v1373 = vunpack.c.l.b16 %v1284
        %v1374 = vunpack.c.l.b16 %v1285
        %v1375 = vunpack.c.l.b16 %v1286
        %v1376 = vunpack.c.l.b16 %v1287
        %v1377 = vunpack.c.l.b16 %v1288
        %v1378 = vunpack.c.l.b16 %v1289
        %v1379 = vunpack.c.l.b16 %v1290
        %v1380 = vunpack.c.l.b16 %v1291
        %v1381 = vunpack.c.l.b16 %v1292
        %v1382 = vunpack.c.l.b16 %v1293
        %v1383 = vunpack.c.l.b16 %v1294
        %v1384 = vunpack.c.l.b16 %v1295
        %v1385 = vunpack.c.l.b16 %v1296
        %v1386 = vunpack.c.l.b16 %v1297
        %v1387 = vunpack.c.l.b16 %v1298
        %v1388 = vunpack.c.l.b16 %v1299
        %v1389 = vunpack.c.l.b16 %v1300
        %v1390 = vunpack.c.l.b16 %v1301
        %v1391 = vpack.c.b16 %v1360, %v1359
        %v1392 = vpack.c.b16 %v1362, %v1361
        %v1393 = vpack.c.b16 %v1364, %v1363
        %v1394 = vpack.c.b16 %v1366, %v1365
        %v1395 = vpack.c.b16 %v1368, %v1367
        %v1396 = vpack.c.b16 %v1370, %v1369
        %v1397 = vpack.c.b16 %v1372, %v1371
        %v1398 = vpack.c.b16 %v1374, %v1373
        %v1399 = vpack.c.b16 %v1376, %v1375
        %v1400 = vpack.c.b16 %v1378, %v1377
        %v1401 = vpack.c.b16 %v1380, %v1379
        %v1402 = vpack.c.b16 %v1382, %v1381
        %v1403 = vpack.c.b16 %v1384, %v1383
        %v1404 = vpack.c.b16 %v1386, %v1385
        %v1405 = vpack.c.b16 %v1388, %v1387
        %v1406 = vpack.c.b16 %v1390, %v1389
        %1423 = vmatprep.subr.bf16.mxu0 0
        %1424 = vmatpush1.bf16.msra.mxu0 %v1391
        %1425 = vmatprep.subr.bf16.mxu0 0
        %1426 = vmatpush1.bf16.msra.mxu0 %v1392
        %1427 = vmatprep.subr.bf16.mxu0 0
        %1428 = vmatpush1.bf16.msra.mxu0 %v1393
        %1429 = vmatprep.subr.bf16.mxu0 0
        %1430 = vmatpush1.bf16.msra.mxu0 %v1394
        %1431 = vmatprep.subr.bf16.mxu0 0
        %1432 = vmatpush1.bf16.msra.mxu0 %v1395
        %1433 = vmatprep.subr.bf16.mxu0 0
        %1434 = vmatpush1.bf16.msra.mxu0 %v1396
        %1435 = vmatprep.subr.bf16.mxu0 0
        %1436 = vmatpush1.bf16.msra.mxu0 %v1397
        %1437 = vmatprep.subr.bf16.mxu0 0
        %1438 = vmatpush1.bf16.msra.mxu0 %v1398
        %1439 = vmatprep.subr.bf16.mxu0 0
        %1440 = vmatpush1.bf16.msra.mxu0 %v1399
        %1441 = vmatprep.subr.bf16.mxu0 0
        %1442 = vmatpush1.bf16.msra.mxu0 %v1400
        %1443 = vmatprep.subr.bf16.mxu0 0
        %1444 = vmatpush1.bf16.msra.mxu0 %v1401
        %1445 = vmatprep.subr.bf16.mxu0 0
        %1446 = vmatpush1.bf16.msra.mxu0 %v1402
        %1447 = vmatprep.subr.bf16.mxu0 0
        %1448 = vmatpush1.bf16.msra.mxu0 %v1403
        %1449 = vmatprep.subr.bf16.mxu0 0
        %1450 = vmatpush1.bf16.msra.mxu0 %v1404
        %1451 = vmatprep.subr.bf16.mxu0 0
        %1452 = vmatpush1.bf16.msra.mxu0 %v1405
        %1453 = vmatprep.subr.bf16.mxu0 0
        %1454 = vmatpush1.bf16.msra.mxu0 %v1406
        %1455 = vmatprep.mubr.bf16.mxu0 %v1324
        %1456 = vmatmul.mubr.bf16.gmra.mrb[0].mxu0 %v1317
        %v1457 = vpop.f32.mrb[0].mxu0
        %v1458 = vadd.f32 %v1266, %v1457
        %v1459 = vpop.f32.mrb[0].mxu0
        %v1460 = vpop.f32.mrb[0].mxu0
        %v1461 = vpop.f32.mrb[0].mxu0
        %1462 = vdwg.mxu0
        %vm1463 = vcmask 1040384
        %v1464 = vsel %vm1463, %v1458, 0.0
        %1465 = vadd.xlane.f32.xlu0 %v1464
        %v1466 = vpop.xlane.xlu0 %1465
        %v1467 = vmul.f32 %v1466, %v637
        %v1468 = vsub.f32 %v1458, %v1467
        %v1469 = vmul.f32 %v1468, %v1468
        %v1470 = vsel %vm1463, %v1469, 0.0
        %1471 = vadd.xlane.f32.xlu0 %v1470
        %v1472 = vpop.xlane.xlu0 %1471
        %v1473 = vmul.f32 %v1472, %v637
        %v1474 = vadd.f32 %v1473, 1e-05
        %v1475 = vrsqrt.pop %v1474
        %v1476 = vmul.f32 %v1468, %v1475
        %v1477 = vmul.f32 %v1476, %v1267
        %v1478 = vadd.f32 %v1477, %v1268
        %1479 = vst [vmem:[%s433] sm:$0x1] %v1478
        %v1480 = vld [vmem:[%s452] sm:$0xff]
        %v1481 = vld [vmem:[%s452 + $0x8] sm:$0xff]
        %v1482 = vld [vmem:[%s452 + $0x10] sm:$0xff]
        %v1483 = vld [vmem:[%s452 + $0x18] sm:$0xff]
        %v1484 = vld [vmem:[%s452 + $0x20] sm:$0xff]
        %v1485 = vld [vmem:[%s452 + $0x28] sm:$0xff]
        %v1486 = vld [vmem:[%s452 + $0x30] sm:$0xff]
        %v1487 = vld [vmem:[%s452 + $0x38] sm:$0xff]
        %v1488 = vld [vmem:[%s452 + $0x40] sm:$0xff]
        %v1489 = vld [vmem:[%s452 + $0x48] sm:$0xff]
        %v1490 = vld [vmem:[%s452 + $0x50] sm:$0xff]
        %v1491 = vld [vmem:[%s452 + $0x58] sm:$0xff]
        %v1492 = vld [vmem:[%s452 + $0x60] sm:$0xff]
        %v1493 = vld [vmem:[%s452 + $0x68] sm:$0xff]
        %v1494 = vld [vmem:[%s452 + $0x70] sm:$0xff]
        %v1495 = vld [vmem:[%s452 + $0x78] sm:$0xff]
        %v1496 = vld [vmem:[%s452 + $0x80] sm:$0xff]
        %v1497 = vld [vmem:[%s452 + $0x88] sm:$0xff]
        %v1498 = vld [vmem:[%s452 + $0x90] sm:$0xff]
        %v1499 = vld [vmem:[%s452 + $0x98] sm:$0xff]
        %v1500 = vld [vmem:[%s452 + $0xa0] sm:$0xff]
        %v1501 = vld [vmem:[%s452 + $0xa8] sm:$0xff]
        %v1502 = vld [vmem:[%s452 + $0xb0] sm:$0xff]
        %v1503 = vld [vmem:[%s452 + $0xb8] sm:$0xff]
        %v1504 = vld [vmem:[%s452 + $0xc0] sm:$0x33]
        %v1505 = vld [vmem:[%s8] sm:$0xf]
        %v1506 = vld [vmem:[%s8 + $0x4] sm:$0xf]
        %v1507 = vld [vmem:[%s8 + $0x8] sm:$0xf]
        %v1508 = vld [vmem:[%s8 + $0xc] sm:$0xf]
        %v1509 = vld [vmem:[%s8 + $0x10] sm:$0xf]
        %v1510 = vld [vmem:[%s8 + $0x14] sm:$0xf]
        %v1511 = vld [vmem:[%s8 + $0x18] sm:$0xf]
        %v1512 = vld [vmem:[%s8 + $0x1c] sm:$0xf]
        %v1513 = vld [vmem:[%s8 + $0x20] sm:$0xf]
        %v1514 = vld [vmem:[%s8 + $0x24] sm:$0xf]
        %v1515 = vld [vmem:[%s8 + $0x28] sm:$0xf]
        %v1516 = vld [vmem:[%s8 + $0x2c] sm:$0xf]
        %v1517 = vld [vmem:[%s8 + $0x30] sm:$0xf]
        %v1518 = vld [vmem:[%s8 + $0x34] sm:$0xf]
        %v1519 = vld [vmem:[%s8 + $0x38] sm:$0xf]
        %v1520 = vld [vmem:[%s8 + $0x3c] sm:$0xf]
        %v1521 = vld [vmem:[%s8 + $0x40] sm:$0xf]
        %v1522 = vld [vmem:[%s8 + $0x44] sm:$0xf]
        %v1523 = vld [vmem:[%s8 + $0x48] sm:$0xf]
        %v1524 = vld [vmem:[%s8 + $0x4c] sm:$0xf]
        %v1525 = vld [vmem:[%s8 + $0x50] sm:$0xf]
        %v1526 = vld [vmem:[%s8 + $0x54] sm:$0xf]
        %v1527 = vld [vmem:[%s8 + $0x58] sm:$0xf]
        %v1528 = vld [vmem:[%s8 + $0x5c] sm:$0xf]
        %v1529 = vld [vmem:[%s8 + $0x60] sm:$0xf]
        %v1530 = vld [vmem:[%s8 + $0x64] sm:$0xf]
        %v1531 = vld [vmem:[%s8 + $0x68] sm:$0xf]
        %v1532 = vld [vmem:[%s8 + $0x6c] sm:$0xf]
        %v1533 = vld [vmem:[%s8 + $0x70] sm:$0xf]
        %v1534 = vld [vmem:[%s8 + $0x74] sm:$0xf]
        %v1535 = vld [vmem:[%s8 + $0x78] sm:$0xf]
        %v1536 = vld [vmem:[%s8 + $0x7c] sm:$0xf]
        %v1562 = vunpack.c.l.b16 %v1480
        %v1563 = vunpack.c.h.b16 %v1480
        %v1564 = vunpack.c.l.b16 %v1481
        %v1565 = vunpack.c.h.b16 %v1481
        %v1566 = vunpack.c.l.b16 %v1482
        %v1567 = vunpack.c.h.b16 %v1482
        %v1568 = vunpack.c.l.b16 %v1483
        %v1569 = vunpack.c.h.b16 %v1483
        %v1570 = vunpack.c.l.b16 %v1484
        %v1571 = vunpack.c.h.b16 %v1484
        %v1572 = vunpack.c.l.b16 %v1485
        %v1573 = vunpack.c.h.b16 %v1485
        %v1574 = vunpack.c.l.b16 %v1486
        %v1575 = vunpack.c.h.b16 %v1486
        %v1576 = vunpack.c.l.b16 %v1487
        %v1577 = vunpack.c.h.b16 %v1487
        %v1578 = vunpack.c.l.b16 %v1488
        %v1579 = vunpack.c.h.b16 %v1488
        %v1580 = vunpack.c.l.b16 %v1489
        %v1581 = vunpack.c.h.b16 %v1489
        %v1582 = vunpack.c.l.b16 %v1490
        %v1583 = vunpack.c.h.b16 %v1490
        %v1584 = vunpack.c.l.b16 %v1491
        %v1585 = vunpack.c.h.b16 %v1491
        %v1586 = vunpack.c.l.b16 %v1492
        %v1587 = vunpack.c.h.b16 %v1492
        %v1588 = vunpack.c.l.b16 %v1493
        %v1589 = vunpack.c.h.b16 %v1493
        %v1590 = vunpack.c.l.b16 %v1494
        %v1591 = vunpack.c.h.b16 %v1494
        %v1592 = vunpack.c.l.b16 %v1495
        %v1593 = vunpack.c.h.b16 %v1495
        %v1594 = vunpack.c.l.b16 %v1496
        %v1595 = vunpack.c.h.b16 %v1496
        %v1596 = vunpack.c.l.b16 %v1497
        %v1597 = vunpack.c.h.b16 %v1497
        %v1598 = vunpack.c.l.b16 %v1498
        %v1599 = vunpack.c.h.b16 %v1498
        %v1600 = vunpack.c.l.b16 %v1499
        %v1601 = vunpack.c.h.b16 %v1499
        %v1602 = vunpack.c.l.b16 %v1500
        %v1603 = vunpack.c.h.b16 %v1500
        %v1604 = vunpack.c.l.b16 %v1501
        %v1605 = vunpack.c.h.b16 %v1501
        %v1606 = vunpack.c.l.b16 %v1502
        %v1607 = vunpack.c.h.b16 %v1502
        %v1608 = vunpack.c.l.b16 %v1503
        %v1609 = vunpack.c.h.b16 %v1503
        %v1610 = vunpack.c.l.b16 %v1504
        %v1611 = vunpack.c.h.b16 %v1504
        %v1612 = vpack.c.b16 %v1564, %v1562
        %v1613 = vpack.c.b16 %v1565, %v1563
        %v1614 = vpack.c.b16 %v1568, %v1566
        %v1615 = vpack.c.b16 %v1569, %v1567
        %v1616 = vpack.c.b16 %v1572, %v1570
        %v1617 = vpack.c.b16 %v1573, %v1571
        %v1618 = vpack.c.b16 %v1576, %v1574
        %v1619 = vpack.c.b16 %v1577, %v1575
        %v1620 = vpack.c.b16 %v1580, %v1578
        %v1621 = vpack.c.b16 %v1581, %v1579
        %v1622 = vpack.c.b16 %v1584, %v1582
        %v1623 = vpack.c.b16 %v1585, %v1583
        %v1624 = vpack.c.b16 %v1588, %v1586
        %v1625 = vpack.c.b16 %v1589, %v1587
        %v1626 = vpack.c.b16 %v1592, %v1590
        %v1627 = vpack.c.b16 %v1593, %v1591
        %v1628 = vpack.c.b16 %v1596, %v1594
        %v1629 = vpack.c.b16 %v1597, %v1595
        %v1630 = vpack.c.b16 %v1600, %v1598
        %v1631 = vpack.c.b16 %v1601, %v1599
        %v1632 = vpack.c.b16 %v1604, %v1602
        %v1633 = vpack.c.b16 %v1605, %v1603
        %v1634 = vpack.c.b16 %v1608, %v1606
        %v1635 = vpack.c.b16 %v1609, %v1607
        %v1636 = vpack.c.b16 %v1610, %v1610
        %v1637 = vpack.c.b16 %v1611, %v1611
        %v1696 = vunpack.c.l.b16 %v1505
        %v1697 = vunpack.c.l.b16 %v1506
        %v1698 = vunpack.c.l.b16 %v1507
        %v1699 = vunpack.c.l.b16 %v1508
        %v1700 = vunpack.c.l.b16 %v1509
        %v1701 = vunpack.c.l.b16 %v1510
        %v1702 = vunpack.c.l.b16 %v1511
        %v1703 = vunpack.c.l.b16 %v1512
        %v1704 = vunpack.c.l.b16 %v1513
        %v1705 = vunpack.c.l.b16 %v1514
        %v1706 = vunpack.c.l.b16 %v1515
        %v1707 = vunpack.c.l.b16 %v1516
        %v1708 = vunpack.c.l.b16 %v1517
        %v1709 = vunpack.c.l.b16 %v1518
        %v1710 = vunpack.c.l.b16 %v1519
        %v1711 = vunpack.c.l.b16 %v1520
        %v1712 = vunpack.c.l.b16 %v1521
        %v1713 = vunpack.c.l.b16 %v1522
        %v1714 = vunpack.c.l.b16 %v1523
        %v1715 = vunpack.c.l.b16 %v1524
        %v1716 = vunpack.c.l.b16 %v1525
        %v1717 = vunpack.c.l.b16 %v1526
        %v1718 = vunpack.c.l.b16 %v1527
        %v1719 = vunpack.c.l.b16 %v1528
        %v1720 = vunpack.c.l.b16 %v1529
        %v1721 = vunpack.c.l.b16 %v1530
        %v1722 = vunpack.c.l.b16 %v1531
        %v1723 = vunpack.c.l.b16 %v1532
        %v1724 = vunpack.c.l.b16 %v1533
        %v1725 = vunpack.c.l.b16 %v1534
        %v1726 = vunpack.c.l.b16 %v1535
        %v1727 = vunpack.c.l.b16 %v1536
        %v1728 = vpack.c.b16 %v1697, %v1696
        %v1729 = vpack.c.b16 %v1699, %v1698
        %v1730 = vpack.c.b16 %v1701, %v1700
        %v1731 = vpack.c.b16 %v1703, %v1702
        %v1732 = vpack.c.b16 %v1705, %v1704
        %v1733 = vpack.c.b16 %v1707, %v1706
        %v1734 = vpack.c.b16 %v1709, %v1708
        %v1735 = vpack.c.b16 %v1711, %v1710
        %v1736 = vpack.c.b16 %v1713, %v1712
        %v1737 = vpack.c.b16 %v1715, %v1714
        %v1738 = vpack.c.b16 %v1717, %v1716
        %v1739 = vpack.c.b16 %v1719, %v1718
        %v1740 = vpack.c.b16 %v1721, %v1720
        %v1741 = vpack.c.b16 %v1723, %v1722
        %v1742 = vpack.c.b16 %v1725, %v1724
        %v1743 = vpack.c.b16 %v1727, %v1726
        %1760 = vmatprep.subr.bf16.mxu0 0
        %1761 = vmatpush1.bf16.msra.mxu0 %v1728
        %1762 = vmatprep.subr.bf16.mxu0 0
        %1763 = vmatpush1.bf16.msra.mxu0 %v1729
        %1764 = vmatprep.subr.bf16.mxu0 0
        %1765 = vmatpush1.bf16.msra.mxu0 %v1730
        %1766 = vmatprep.subr.bf16.mxu0 0
        %1767 = vmatpush1.bf16.msra.mxu0 %v1731
        %1768 = vmatprep.subr.bf16.mxu0 0
        %1769 = vmatpush1.bf16.msra.mxu0 %v1732
        %1770 = vmatprep.subr.bf16.mxu0 0
        %1771 = vmatpush1.bf16.msra.mxu0 %v1733
        %1772 = vmatprep.subr.bf16.mxu0 0
        %1773 = vmatpush1.bf16.msra.mxu0 %v1734
        %1774 = vmatprep.subr.bf16.mxu0 0
        %1775 = vmatpush1.bf16.msra.mxu0 %v1735
        %1776 = vmatprep.subr.bf16.mxu0 0
        %1777 = vmatpush1.bf16.msra.mxu0 %v1736
        %1778 = vmatprep.subr.bf16.mxu0 0
        %1779 = vmatpush1.bf16.msra.mxu0 %v1737
        %1780 = vmatprep.subr.bf16.mxu0 0
        %1781 = vmatpush1.bf16.msra.mxu0 %v1738
        %1782 = vmatprep.subr.bf16.mxu0 0
        %1783 = vmatpush1.bf16.msra.mxu0 %v1739
        %1784 = vmatprep.subr.bf16.mxu0 0
        %1785 = vmatpush1.bf16.msra.mxu0 %v1740
        %1786 = vmatprep.subr.bf16.mxu0 0
        %1787 = vmatpush1.bf16.msra.mxu0 %v1741
        %1788 = vmatprep.subr.bf16.mxu0 0
        %1789 = vmatpush1.bf16.msra.mxu0 %v1742
        %1790 = vmatprep.subr.bf16.mxu0 0
        %1791 = vmatpush1.bf16.msra.mxu0 %v1743
        %1792 = vmatprep.mubr.bf16.mxu0 %v1613
        %1793 = vmatmul.mubr.bf16.gmra.mrb[0].mxu0 %v1612
        %v1794 = vpop.f32.mrb[0].mxu0
        %v1795 = vadd.f32 %v1266, %v1794
        %v1796 = vpop.f32.mrb[0].mxu0
        %v1797 = vpop.f32.mrb[0].mxu0
        %v1798 = vadd.f32 %v1266, %v1797
        %v1799 = vpop.f32.mrb[0].mxu0
        %1800 = vmatprep.mubr.bf16.mxu0 %v1615
        %1801 = vmatmul.mubr.bf16.gmra.mrb[0].mxu0 %v1614
        %v1802 = vpop.f32.mrb[0].mxu0
        %v1803 = vadd.f32 %v1266, %v1802
        %v1804 = vpop.f32.mrb[0].mxu0
        %v1805 = vpop.f32.mrb[0].mxu0
        %v1806 = vadd.f32 %v1266, %v1805
        %v1807 = vpop.f32.mrb[0].mxu0
        %1808 = vmatprep.mubr.bf16.mxu0 %v1617
        %1809 = vmatmul.mubr.bf16.gmra.mrb[0].mxu0 %v1616
        %v1810 = vpop.f32.mrb[0].mxu0
        %v1811 = vadd.f32 %v1266, %v1810
        %v1812 = vpop.f32.mrb[0].mxu0
        %v1813 = vpop.f32.mrb[0].mxu0
        %v1814 = vadd.f32 %v1266, %v1813
        %v1815 = vpop.f32.mrb[0].mxu0
        %1816 = vmatprep.mubr.bf16.mxu0 %v1619
        %1817 = vmatmul.mubr.bf16.gmra.mrb[0].mxu0 %v1618
        %v1818 = vpop.f32.mrb[0].mxu0
        %v1819 = vadd.f32 %v1266, %v1818
        %v1820 = vpop.f32.mrb[0].mxu0
        %v1821 = vpop.f32.mrb[0].mxu0
        %v1822 = vadd.f32 %v1266, %v1821
        %v1823 = vpop.f32.mrb[0].mxu0
        %1824 = vmatprep.mubr.bf16.mxu0 %v1621
        %1825 = vmatmul.mubr.bf16.gmra.mrb[0].mxu0 %v1620
        %v1826 = vpop.f32.mrb[0].mxu0
        %v1827 = vadd.f32 %v1266, %v1826
        %v1828 = vpop.f32.mrb[0].mxu0
        %v1829 = vpop.f32.mrb[0].mxu0
        %v1830 = vadd.f32 %v1266, %v1829
        %v1831 = vpop.f32.mrb[0].mxu0
        %1832 = vmatprep.mubr.bf16.mxu0 %v1623
        %1833 = vmatmul.mubr.bf16.gmra.mrb[0].mxu0 %v1622
        %v1834 = vpop.f32.mrb[0].mxu0
        %v1835 = vadd.f32 %v1266, %v1834
        %v1836 = vpop.f32.mrb[0].mxu0
        %v1837 = vpop.f32.mrb[0].mxu0
        %v1838 = vadd.f32 %v1266, %v1837
        %v1839 = vpop.f32.mrb[0].mxu0
        %1840 = vmatprep.mubr.bf16.mxu0 %v1625
        %1841 = vmatmul.mubr.bf16.gmra.mrb[0].mxu0 %v1624
        %v1842 = vpop.f32.mrb[0].mxu0
        %v1843 = vadd.f32 %v1266, %v1842
        %v1844 = vpop.f32.mrb[0].mxu0
        %v1845 = vpop.f32.mrb[0].mxu0
        %v1846 = vadd.f32 %v1266, %v1845
        %v1847 = vpop.f32.mrb[0].mxu0
        %1848 = vmatprep.mubr.bf16.mxu0 %v1627
        %1849 = vmatmul.mubr.bf16.gmra.mrb[0].mxu0 %v1626
        %v1850 = vpop.f32.mrb[0].mxu0
        %v1851 = vadd.f32 %v1266, %v1850
        %v1852 = vpop.f32.mrb[0].mxu0
        %v1853 = vpop.f32.mrb[0].mxu0
        %v1854 = vadd.f32 %v1266, %v1853
        %v1855 = vpop.f32.mrb[0].mxu0
        %1856 = vmatprep.mubr.bf16.mxu0 %v1629
        %1857 = vmatmul.mubr.bf16.gmra.mrb[0].mxu0 %v1628
        %v1858 = vpop.f32.mrb[0].mxu0
        %v1859 = vadd.f32 %v1266, %v1858
        %v1860 = vpop.f32.mrb[0].mxu0
        %v1861 = vpop.f32.mrb[0].mxu0
        %v1862 = vadd.f32 %v1266, %v1861
        %v1863 = vpop.f32.mrb[0].mxu0
        %1864 = vmatprep.mubr.bf16.mxu0 %v1631
        %1865 = vmatmul.mubr.bf16.gmra.mrb[0].mxu0 %v1630
        %v1866 = vpop.f32.mrb[0].mxu0
        %v1867 = vadd.f32 %v1266, %v1866
        %v1868 = vpop.f32.mrb[0].mxu0
        %v1869 = vpop.f32.mrb[0].mxu0
        %v1870 = vadd.f32 %v1266, %v1869
        %v1871 = vpop.f32.mrb[0].mxu0
        %1872 = vmatprep.mubr.bf16.mxu0 %v1633
        %1873 = vmatmul.mubr.bf16.gmra.mrb[0].mxu0 %v1632
        %v1874 = vpop.f32.mrb[0].mxu0
        %v1875 = vadd.f32 %v1266, %v1874
        %v1876 = vpop.f32.mrb[0].mxu0
        %v1877 = vpop.f32.mrb[0].mxu0
        %v1878 = vadd.f32 %v1266, %v1877
        %v1879 = vpop.f32.mrb[0].mxu0
        %1880 = vmatprep.mubr.bf16.mxu0 %v1635
        %1881 = vmatmul.mubr.bf16.gmra.mrb[0].mxu0 %v1634
        %v1882 = vpop.f32.mrb[0].mxu0
        %v1883 = vadd.f32 %v1266, %v1882
        %v1884 = vpop.f32.mrb[0].mxu0
        %v1885 = vpop.f32.mrb[0].mxu0
        %v1886 = vadd.f32 %v1266, %v1885
        %v1887 = vpop.f32.mrb[0].mxu0
        %1888 = vmatprep.mubr.bf16.mxu0 %v1637
        %1889 = vmatmul.mubr.bf16.gmra.mrb[0].mxu0 %v1636
        %v1890 = vpop.f32.mrb[0].mxu0
        %v1891 = vadd.f32 %v1266, %v1890
        %v1892 = vpop.f32.mrb[0].mxu0
        %v1893 = vpop.f32.mrb[0].mxu0
        %v1894 = vpop.f32.mrb[0].mxu0
        %1895 = vdwg.mxu0
        %1896 = vadd.xlane.f32.xlu0 %v1795
        %v1897 = vpop.xlane.xlu0 %1896
        %1898 = vadd.xlane.f32.xlu0 %v1798
        %v1899 = vpop.xlane.xlu0 %1898
        %1900 = vadd.xlane.f32.xlu0 %v1803
        %v1901 = vpop.xlane.xlu0 %1900
        %1902 = vadd.xlane.f32.xlu0 %v1806
        %v1903 = vpop.xlane.xlu0 %1902
        %1904 = vadd.xlane.f32.xlu0 %v1811
        %v1905 = vpop.xlane.xlu0 %1904
        %1906 = vadd.xlane.f32.xlu0 %v1814
        %v1907 = vpop.xlane.xlu0 %1906
        %1908 = vadd.xlane.f32.xlu0 %v1819
        %v1909 = vpop.xlane.xlu0 %1908
        %1910 = vadd.xlane.f32.xlu0 %v1822
        %v1911 = vpop.xlane.xlu0 %1910
        %1912 = vadd.xlane.f32.xlu0 %v1827
        %v1913 = vpop.xlane.xlu0 %1912
        %1914 = vadd.xlane.f32.xlu0 %v1830
        %v1915 = vpop.xlane.xlu0 %1914
        %1916 = vadd.xlane.f32.xlu0 %v1835
        %v1917 = vpop.xlane.xlu0 %1916
        %1918 = vadd.xlane.f32.xlu0 %v1838
        %v1919 = vpop.xlane.xlu0 %1918
        %1920 = vadd.xlane.f32.xlu0 %v1843
        %v1921 = vpop.xlane.xlu0 %1920
        %1922 = vadd.xlane.f32.xlu0 %v1846
        %v1923 = vpop.xlane.xlu0 %1922
        %1924 = vadd.xlane.f32.xlu0 %v1851
        %v1925 = vpop.xlane.xlu0 %1924
        %1926 = vadd.xlane.f32.xlu0 %v1854
        %v1927 = vpop.xlane.xlu0 %1926
        %1928 = vadd.xlane.f32.xlu0 %v1859
        %v1929 = vpop.xlane.xlu0 %1928
        %1930 = vadd.xlane.f32.xlu0 %v1862
        %v1931 = vpop.xlane.xlu0 %1930
        %1932 = vadd.xlane.f32.xlu0 %v1867
        %v1933 = vpop.xlane.xlu0 %1932
        %1934 = vadd.xlane.f32.xlu0 %v1870
        %v1935 = vpop.xlane.xlu0 %1934
        %1936 = vadd.xlane.f32.xlu0 %v1875
        %v1937 = vpop.xlane.xlu0 %1936
        %1938 = vadd.xlane.f32.xlu0 %v1878
        %v1939 = vpop.xlane.xlu0 %1938
        %1940 = vadd.xlane.f32.xlu0 %v1883
        %v1941 = vpop.xlane.xlu0 %1940
        %1942 = vadd.xlane.f32.xlu0 %v1886
        %v1943 = vpop.xlane.xlu0 %1942
        %vm1944 = vcmask 1043456
        %v1945 = vsel %vm1944, %v1891, 0.0
        %1946 = vadd.xlane.f32.xlu0 %v1945
        %v1947 = vpop.xlane.xlu0 %1946
        %v1948 = vmul.f32 %v1897, %v637
        %v1949 = vmul.f32 %v1899, %v637
        %v1950 = vmul.f32 %v1901, %v637
        %v1951 = vmul.f32 %v1903, %v637
        %v1952 = vmul.f32 %v1905, %v637
        %v1953 = vmul.f32 %v1907, %v637
        %v1954 = vmul.f32 %v1909, %v637
        %v1955 = vmul.f32 %v1911, %v637
        %v1956 = vmul.f32 %v1913, %v637
        %v1957 = vmul.f32 %v1915, %v637
        %v1958 = vmul.f32 %v1917, %v637
        %v1959 = vmul.f32 %v1919, %v637
        %v1960 = vmul.f32 %v1921, %v637
        %v1961 = vmul.f32 %v1923, %v637
        %v1962 = vmul.f32 %v1925, %v637
        %v1963 = vmul.f32 %v1927, %v637
        %v1964 = vmul.f32 %v1929, %v637
        %v1965 = vmul.f32 %v1931, %v637
        %v1966 = vmul.f32 %v1933, %v637
        %v1967 = vmul.f32 %v1935, %v637
        %v1968 = vmul.f32 %v1937, %v637
        %v1969 = vmul.f32 %v1939, %v637
        %v1970 = vmul.f32 %v1941, %v637
        %v1971 = vmul.f32 %v1943, %v637
        %v1972 = vmul.f32 %v1947, %v637
        %v1973 = vsub.f32 %v1795, %v1948
        %v1974 = vsub.f32 %v1798, %v1949
        %v1975 = vsub.f32 %v1803, %v1950
        %v1976 = vsub.f32 %v1806, %v1951
        %v1977 = vsub.f32 %v1811, %v1952
        %v1978 = vsub.f32 %v1814, %v1953
        %v1979 = vsub.f32 %v1819, %v1954
        %v1980 = vsub.f32 %v1822, %v1955
        %v1981 = vsub.f32 %v1827, %v1956
        %v1982 = vsub.f32 %v1830, %v1957
        %v1983 = vsub.f32 %v1835, %v1958
        %v1984 = vsub.f32 %v1838, %v1959
        %v1985 = vsub.f32 %v1843, %v1960
        %v1986 = vsub.f32 %v1846, %v1961
        %v1987 = vsub.f32 %v1851, %v1962
        %v1988 = vsub.f32 %v1854, %v1963
        %v1989 = vsub.f32 %v1859, %v1964
        %v1990 = vsub.f32 %v1862, %v1965
        %v1991 = vsub.f32 %v1867, %v1966
        %v1992 = vsub.f32 %v1870, %v1967
        %v1993 = vsub.f32 %v1875, %v1968
        %v1994 = vsub.f32 %v1878, %v1969
        %v1995 = vsub.f32 %v1883, %v1970
        %v1996 = vsub.f32 %v1886, %v1971
        %v1997 = vsub.f32 %v1891, %v1972
        %v1998 = vmul.f32 %v1973, %v1973
        %v1999 = vmul.f32 %v1974, %v1974
        %v2000 = vmul.f32 %v1975, %v1975
        %v2001 = vmul.f32 %v1976, %v1976
        %v2002 = vmul.f32 %v1977, %v1977
        %v2003 = vmul.f32 %v1978, %v1978
        %v2004 = vmul.f32 %v1979, %v1979
        %v2005 = vmul.f32 %v1980, %v1980
        %v2006 = vmul.f32 %v1981, %v1981
        %v2007 = vmul.f32 %v1982, %v1982
        %v2008 = vmul.f32 %v1983, %v1983
        %v2009 = vmul.f32 %v1984, %v1984
        %v2010 = vmul.f32 %v1985, %v1985
        %v2011 = vmul.f32 %v1986, %v1986
        %v2012 = vmul.f32 %v1987, %v1987
        %v2013 = vmul.f32 %v1988, %v1988
        %v2014 = vmul.f32 %v1989, %v1989
        %v2015 = vmul.f32 %v1990, %v1990
        %v2016 = vmul.f32 %v1991, %v1991
        %v2017 = vmul.f32 %v1992, %v1992
        %v2018 = vmul.f32 %v1993, %v1993
        %v2019 = vmul.f32 %v1994, %v1994
        %v2020 = vmul.f32 %v1995, %v1995
        %v2021 = vmul.f32 %v1996, %v1996
        %v2022 = vmul.f32 %v1997, %v1997
        %2023 = vadd.xlane.f32.xlu0 %v1998
        %v2024 = vpop.xlane.xlu0 %2023
        %2025 = vadd.xlane.f32.xlu0 %v1999
        %v2026 = vpop.xlane.xlu0 %2025
        %2027 = vadd.xlane.f32.xlu0 %v2000
        %v2028 = vpop.xlane.xlu0 %2027
        %2029 = vadd.xlane.f32.xlu0 %v2001
        %v2030 = vpop.xlane.xlu0 %2029
        %2031 = vadd.xlane.f32.xlu0 %v2002
        %v2032 = vpop.xlane.xlu0 %2031
        %2033 = vadd.xlane.f32.xlu0 %v2003
        %v2034 = vpop.xlane.xlu0 %2033
        %2035 = vadd.xlane.f32.xlu0 %v2004
        %v2036 = vpop.xlane.xlu0 %2035
        %2037 = vadd.xlane.f32.xlu0 %v2005
        %v2038 = vpop.xlane.xlu0 %2037
        %2039 = vadd.xlane.f32.xlu0 %v2006
        %v2040 = vpop.xlane.xlu0 %2039
        %2041 = vadd.xlane.f32.xlu0 %v2007
        %v2042 = vpop.xlane.xlu0 %2041
        %2043 = vadd.xlane.f32.xlu0 %v2008
        %v2044 = vpop.xlane.xlu0 %2043
        %2045 = vadd.xlane.f32.xlu0 %v2009
        %v2046 = vpop.xlane.xlu0 %2045
        %2047 = vadd.xlane.f32.xlu0 %v2010
        %v2048 = vpop.xlane.xlu0 %2047
        %2049 = vadd.xlane.f32.xlu0 %v2011
        %v2050 = vpop.xlane.xlu0 %2049
        %2051 = vadd.xlane.f32.xlu0 %v2012
        %v2052 = vpop.xlane.xlu0 %2051
        %2053 = vadd.xlane.f32.xlu0 %v2013
        %v2054 = vpop.xlane.xlu0 %2053
        %2055 = vadd.xlane.f32.xlu0 %v2014
        %v2056 = vpop.xlane.xlu0 %2055
        %2057 = vadd.xlane.f32.xlu0 %v2015
        %v2058 = vpop.xlane.xlu0 %2057
        %2059 = vadd.xlane.f32.xlu0 %v2016
        %v2060 = vpop.xlane.xlu0 %2059
        %2061 = vadd.xlane.f32.xlu0 %v2017
        %v2062 = vpop.xlane.xlu0 %2061
        %2063 = vadd.xlane.f32.xlu0 %v2018
        %v2064 = vpop.xlane.xlu0 %2063
        %2065 = vadd.xlane.f32.xlu0 %v2019
        %v2066 = vpop.xlane.xlu0 %2065
        %2067 = vadd.xlane.f32.xlu0 %v2020
        %v2068 = vpop.xlane.xlu0 %2067
        %2069 = vadd.xlane.f32.xlu0 %v2021
        %v2070 = vpop.xlane.xlu0 %2069
        %v2071 = vsel %vm1944, %v2022, 0.0
        %2072 = vadd.xlane.f32.xlu0 %v2071
        %v2073 = vpop.xlane.xlu0 %2072
        %v2074 = vmul.f32 %v2024, %v637
        %v2075 = vmul.f32 %v2026, %v637
        %v2076 = vmul.f32 %v2028, %v637
        %v2077 = vmul.f32 %v2030, %v637
        %v2078 = vmul.f32 %v2032, %v637
        %v2079 = vmul.f32 %v2034, %v637
        %v2080 = vmul.f32 %v2036, %v637
        %v2081 = vmul.f32 %v2038, %v637
        %v2082 = vmul.f32 %v2040, %v637
        %v2083 = vmul.f32 %v2042, %v637
        %v2084 = vmul.f32 %v2044, %v637
        %v2085 = vmul.f32 %v2046, %v637
        %v2086 = vmul.f32 %v2048, %v637
        %v2087 = vmul.f32 %v2050, %v637
        %v2088 = vmul.f32 %v2052, %v637
        %v2089 = vmul.f32 %v2054, %v637
        %v2090 = vmul.f32 %v2056, %v637
        %v2091 = vmul.f32 %v2058, %v637
        %v2092 = vmul.f32 %v2060, %v637
        %v2093 = vmul.f32 %v2062, %v637
        %v2094 = vmul.f32 %v2064, %v637
        %v2095 = vmul.f32 %v2066, %v637
        %v2096 = vmul.f32 %v2068, %v637
        %v2097 = vmul.f32 %v2070, %v637
        %v2098 = vmul.f32 %v2073, %v637
        %v2099 = vadd.f32 %v2074, 1e-05
        %v2100 = vadd.f32 %v2075, 1e-05
        %v2101 = vadd.f32 %v2076, 1e-05
        %v2102 = vadd.f32 %v2077, 1e-05
        %v2103 = vadd.f32 %v2078, 1e-05
        %v2104 = vadd.f32 %v2079, 1e-05
        %v2105 = vadd.f32 %v2080, 1e-05
        %v2106 = vadd.f32 %v2081, 1e-05
        %v2107 = vadd.f32 %v2082, 1e-05
        %v2108 = vadd.f32 %v2083, 1e-05
        %v2109 = vadd.f32 %v2084, 1e-05
        %v2110 = vadd.f32 %v2085, 1e-05
        %v2111 = vadd.f32 %v2086, 1e-05
        %v2112 = vadd.f32 %v2087, 1e-05
        %v2113 = vadd.f32 %v2088, 1e-05
        %v2114 = vadd.f32 %v2089, 1e-05
        %v2115 = vadd.f32 %v2090, 1e-05
        %v2116 = vadd.f32 %v2091, 1e-05
        %v2117 = vadd.f32 %v2092, 1e-05
        %v2118 = vadd.f32 %v2093, 1e-05
        %v2119 = vadd.f32 %v2094, 1e-05
        %v2120 = vadd.f32 %v2095, 1e-05
        %v2121 = vadd.f32 %v2096, 1e-05
        %v2122 = vadd.f32 %v2097, 1e-05
        %v2123 = vadd.f32 %v2098, 1e-05
        %v2124 = vrsqrt.pop %v2099
        %v2125 = vrsqrt.pop %v2100
        %v2126 = vrsqrt.pop %v2101
        %v2127 = vrsqrt.pop %v2102
        %v2128 = vrsqrt.pop %v2103
        %v2129 = vrsqrt.pop %v2104
        %v2130 = vrsqrt.pop %v2105
        %v2131 = vrsqrt.pop %v2106
        %v2132 = vrsqrt.pop %v2107
        %v2133 = vrsqrt.pop %v2108
        %v2134 = vrsqrt.pop %v2109
        %v2135 = vrsqrt.pop %v2110
        %v2136 = vrsqrt.pop %v2111
        %v2137 = vrsqrt.pop %v2112
        %v2138 = vrsqrt.pop %v2113
        %v2139 = vrsqrt.pop %v2114
        %v2140 = vrsqrt.pop %v2115
        %v2141 = vrsqrt.pop %v2116
        %v2142 = vrsqrt.pop %v2117
        %v2143 = vrsqrt.pop %v2118
        %v2144 = vrsqrt.pop %v2119
        %v2145 = vrsqrt.pop %v2120
        %v2146 = vrsqrt.pop %v2121
        %v2147 = vrsqrt.pop %v2122
        %v2148 = vrsqrt.pop %v2123
        %v2149 = vmul.f32 %v1973, %v2124
        %v2150 = vmul.f32 %v1974, %v2125
        %v2151 = vmul.f32 %v1975, %v2126
        %v2152 = vmul.f32 %v1976, %v2127
        %v2153 = vmul.f32 %v1977, %v2128
        %v2154 = vmul.f32 %v1978, %v2129
        %v2155 = vmul.f32 %v1979, %v2130
        %v2156 = vmul.f32 %v1980, %v2131
        %v2157 = vmul.f32 %v1981, %v2132
        %v2158 = vmul.f32 %v1982, %v2133
        %v2159 = vmul.f32 %v1983, %v2134
        %v2160 = vmul.f32 %v1984, %v2135
        %v2161 = vmul.f32 %v1985, %v2136
        %v2162 = vmul.f32 %v1986, %v2137
        %v2163 = vmul.f32 %v1987, %v2138
        %v2164 = vmul.f32 %v1988, %v2139
        %v2165 = vmul.f32 %v1989, %v2140
        %v2166 = vmul.f32 %v1990, %v2141
        %v2167 = vmul.f32 %v1991, %v2142
        %v2168 = vmul.f32 %v1992, %v2143
        %v2169 = vmul.f32 %v1993, %v2144
        %v2170 = vmul.f32 %v1994, %v2145
        %v2171 = vmul.f32 %v1995, %v2146
        %v2172 = vmul.f32 %v1996, %v2147
        %v2173 = vmul.f32 %v1997, %v2148
        %v2174 = vmul.f32 %v2149, %v1267
        %v2175 = vmul.f32 %v2150, %v1267
        %v2176 = vmul.f32 %v2151, %v1267
        %v2177 = vmul.f32 %v2152, %v1267
        %v2178 = vmul.f32 %v2153, %v1267
        %v2179 = vmul.f32 %v2154, %v1267
        %v2180 = vmul.f32 %v2155, %v1267
        %v2181 = vmul.f32 %v2156, %v1267
        %v2182 = vmul.f32 %v2157, %v1267
        %v2183 = vmul.f32 %v2158, %v1267
        %v2184 = vmul.f32 %v2159, %v1267
        %v2185 = vmul.f32 %v2160, %v1267
        %v2186 = vmul.f32 %v2161, %v1267
        %v2187 = vmul.f32 %v2162, %v1267
        %v2188 = vmul.f32 %v2163, %v1267
        %v2189 = vmul.f32 %v2164, %v1267
        %v2190 = vmul.f32 %v2165, %v1267
        %v2191 = vmul.f32 %v2166, %v1267
        %v2192 = vmul.f32 %v2167, %v1267
        %v2193 = vmul.f32 %v2168, %v1267
        %v2194 = vmul.f32 %v2169, %v1267
        %v2195 = vmul.f32 %v2170, %v1267
        %v2196 = vmul.f32 %v2171, %v1267
        %v2197 = vmul.f32 %v2172, %v1267
        %v2198 = vmul.f32 %v2173, %v1267
        %v2199 = vadd.f32 %v2174, %v1268
        %v2200 = vadd.f32 %v2175, %v1268
        %v2201 = vadd.f32 %v2176, %v1268
        %v2202 = vadd.f32 %v2177, %v1268
        %v2203 = vadd.f32 %v2178, %v1268
        %v2204 = vadd.f32 %v2179, %v1268
        %v2205 = vadd.f32 %v2180, %v1268
        %v2206 = vadd.f32 %v2181, %v1268
        %v2207 = vadd.f32 %v2182, %v1268
        %v2208 = vadd.f32 %v2183, %v1268
        %v2209 = vadd.f32 %v2184, %v1268
        %v2210 = vadd.f32 %v2185, %v1268
        %v2211 = vadd.f32 %v2186, %v1268
        %v2212 = vadd.f32 %v2187, %v1268
        %v2213 = vadd.f32 %v2188, %v1268
        %v2214 = vadd.f32 %v2189, %v1268
        %v2215 = vadd.f32 %v2190, %v1268
        %v2216 = vadd.f32 %v2191, %v1268
        %v2217 = vadd.f32 %v2192, %v1268
        %v2218 = vadd.f32 %v2193, %v1268
        %v2219 = vadd.f32 %v2194, %v1268
        %v2220 = vadd.f32 %v2195, %v1268
        %v2221 = vadd.f32 %v2196, %v1268
        %v2222 = vadd.f32 %v2197, %v1268
        %v2223 = vadd.f32 %v2198, %v1268
        %2224 = vst [vmem:[%s433 + $0x1] sm:$0xff] %v2199
        %2225 = vst [vmem:[%s433 + $0x9] sm:$0xff] %v2200
        %2226 = vst [vmem:[%s433 + $0x11] sm:$0xff] %v2201
        %2227 = vst [vmem:[%s433 + $0x19] sm:$0xff] %v2202
        %2228 = vst [vmem:[%s433 + $0x21] sm:$0xff] %v2203
        %2229 = vst [vmem:[%s433 + $0x29] sm:$0xff] %v2204
        %2230 = vst [vmem:[%s433 + $0x31] sm:$0xff] %v2205
        %2231 = vst [vmem:[%s433 + $0x39] sm:$0xff] %v2206
        %2232 = vst [vmem:[%s433 + $0x41] sm:$0xff] %v2207
        %2233 = vst [vmem:[%s433 + $0x49] sm:$0xff] %v2208
        %2234 = vst [vmem:[%s433 + $0x51] sm:$0xff] %v2209
        %2235 = vst [vmem:[%s433 + $0x59] sm:$0xff] %v2210
        %2236 = vst [vmem:[%s433 + $0x61] sm:$0xff] %v2211
        %2237 = vst [vmem:[%s433 + $0x69] sm:$0xff] %v2212
        %2238 = vst [vmem:[%s433 + $0x71] sm:$0xff] %v2213
        %2239 = vst [vmem:[%s433 + $0x79] sm:$0xff] %v2214
        %2240 = vst [vmem:[%s433 + $0x81] sm:$0xff] %v2215
        %2241 = vst [vmem:[%s433 + $0x89] sm:$0xff] %v2216
        %2242 = vst [vmem:[%s433 + $0x91] sm:$0xff] %v2217
        %2243 = vst [vmem:[%s433 + $0x99] sm:$0xff] %v2218
        %2244 = vst [vmem:[%s433 + $0xa1] sm:$0xff] %v2219
        %2245 = vst [vmem:[%s433 + $0xa9] sm:$0xff] %v2220
        %2246 = vst [vmem:[%s433 + $0xb1] sm:$0xff] %v2221
        %2247 = vst [vmem:[%s433 + $0xb9] sm:$0xff] %v2222
        %2248 = vst [vmem:[%s433 + $0xc1] sm:$0xf] %v2223
        %s2249 = sand.u32 %s267, 1
        %s2250 = scalar_lea.sflag [#allocation3], %s2249
        %s2251 = sand.u32 %s267, 1
        %s2252 = smul.addr %s2251, 8
        %s2253 = scalar_lea.vmem [#allocation2], %s2252
        %s2254 = sand.u32 %s293, 1
        %s2255 = scalar_lea.sflag [#allocation5], %s2254
        %s2256 = sand.u32 %s293, 1
        %s2257 = smul.addr %s2256, 200
        %s2258 = scalar_lea.vmem [#allocation4], %s2257
        // Predicated region
        $region61: #{tile_tokenizer_forward.1} parent=59 // pred_check
          %p2259 = pneg %p277
        $region62: #{tile_tokenizer_forward.1} parent=59 // pred_check_branch
          %2261 = sbr.rel (%p2259) target = $region64
        $region63: #{tile_tokenizer_forward.1} parent=59 // pred_region
          %s2263 = ssub.s32 128, 128
          %2264 = vsyncadd %s2250, %s2263
          %s2265 = smul.addr %s29, 128
          %s2266 = scalar_lea.hbm %s10, %s2265
          %s2268 = sshll.u32 %s2253, 4
          %s2269 = int_to_ptr.vmem [resolvable:$true] %s2268
          %2271 = dma.vmem_to_hbm [thread:$0]  %s2269, 128, %s2266, %s2250
        $region64: #{tile_tokenizer_forward.1} parent=59 // pred_fallthru
          _
        // Predicated region
        $region65: #{tile_tokenizer_forward.1} parent=59 // pred_check
          %p2272 = pneg %p303
        $region66: #{tile_tokenizer_forward.1} parent=59 // pred_check_branch
          %2274 = sbr.rel (%p2272) target = $region68
        $region67: #{tile_tokenizer_forward.1} parent=59 // pred_region
          %s2276 = ssub.s32 3200, 3200
          %2277 = vsyncadd %s2255, %s2276
          %s2278 = smul.addr %s29, 25
          %s2279 = smul.addr %s2278, 128
          %s2280 = scalar_lea.hbm %s11, %s2279
          %s2281 = sshll.u32 %s2258, 4
          %s2282 = int_to_ptr.vmem [resolvable:$true] %s2281
          %2287 = dma.vmem_to_hbm [thread:$0]  %s2282, 3200, %s2280, %s2255, 128, 128, 8
        $region68: #{tile_tokenizer_forward.1} parent=59 // pred_fallthru
          _
      $region60: #{tile_tokenizer_forward.1} parent=5 // pred_fallthru
        _
      %p2288 = scmp.le.s32.totalorder 2, %s24
      // Predicated region
      $region69: #{tile_tokenizer_forward.1} parent=5 // pred_check
        %p2289 = pneg %p2288
      $region70: #{tile_tokenizer_forward.1} parent=5 // pred_check_branch
        %2291 = sbr.rel (%p2289) target = $region72
      $region71: #{tile_tokenizer_forward.1} parent=5 // pred_region
        %s2292 = ssub.s32 %s24, 2
        // Predicated region
        $region73: #{tile_tokenizer_forward.1} parent=71 // pred_check
          %p2293 = pneg %p283
        $region74: #{tile_tokenizer_forward.1} parent=71 // pred_check_branch
          %2295 = sbr.rel (%p2293) target = $region76
        $region75: #{tile_tokenizer_forward.1} parent=71 // pred_region
          %s2296 = sand.u32 %s268, 1
          %s2297 = scalar_lea.sflag [#allocation3], %s2296
          %s2298 = sand.u32 %s268, 1
          %s2299 = smul.addr %s2298, 8
          %s2300 = scalar_lea.vmem [#allocation2], %s2299
          %2301 = dma.done %s2297, 128
        $region76: #{tile_tokenizer_forward.1} parent=71 // pred_fallthru
          _
        // Predicated region
        $region77: #{tile_tokenizer_forward.1} parent=71 // pred_check
          %p2302 = pneg %p309
        $region78: #{tile_tokenizer_forward.1} parent=71 // pred_check_branch
          %2304 = sbr.rel (%p2302) target = $region80
        $region79: #{tile_tokenizer_forward.1} parent=71 // pred_region
          %s2305 = sand.u32 %s294, 1
          %s2306 = scalar_lea.sflag [#allocation5], %s2305
          %s2307 = sand.u32 %s294, 1
          %s2308 = smul.addr %s2307, 200
          %s2309 = scalar_lea.vmem [#allocation4], %s2308
          %2310 = dma.done %s2306, 3200
        $region80: #{tile_tokenizer_forward.1} parent=71 // pred_fallthru
          _
      $region72: #{tile_tokenizer_forward.1} parent=5 // pred_fallthru
        _
    $region6: #{tile_tokenizer_forward.1} parent=1 // loop_footer
      %s28 = sadd.s32 1, %s24
    $region7: #{tile_tokenizer_forward.1} parent=1 // loop_footer_branch
      %23 = sbr.rel target = $region3
    $region8: #{tile_tokenizer_forward.1} parent=1 // loop_exit
      _
    %2311 = vsyncpa [#allocation3], 1
    %s2312 = scalar_lea.sflag [#allocation3], 1
    %2313 = vsyncpa %s2312, 1
    %2314 = vsyncpa [#allocation5], 1
    %s2315 = scalar_lea.sflag [#allocation5], 1
    %2316 = vsyncpa %s2315, 1

</llo_original>
